<compile_context>
chip_gen: v7x
topology: tpu7x:2x2x1
jax: 0.10.0
libtpu: 0.0.40
codegen_flags: <defaults>
</compile_context>

<pallas_src>
import math

import jax
import jax.numpy as jnp
from jax.experimental import pallas as pl
from jax.experimental.pallas import tpu as pltpu

# ----------------------------- model config ---------------------------------
B = 2        # batch
S = 8        # sequence length
V = 64       # vocab size
D = 32       # d_model
H = 4        # attention heads
DH = D // H  # head dim
F = 64       # FFN hidden dim
EPS = 1e-5   # LayerNorm eps (PyTorch default)
N = B * S    # fused slab rows

# packed-weight column layout inside `wd` (D rows x WD_COLS cols)
QKV_OFF = 0            # [wq*scale | wk | wv]  -> cols [0, 3D)
WO_OFF = 3 * D         # wo                    -> cols [3D, 4D)
W1_OFF = WO_OFF + D    # w1                    -> cols [4D, 4D+F)
WD_COLS = W1_OFF + F

# packed-vector row layout inside `vec` ((8, 128) f32 slab)
R_BQKV, R_BO, R_LN1G, R_LN1B, R_B1, R_B2, R_LN2G, R_LN2B = range(8)
VEC_LANES = 128


# ------------------------------- kernel -------------------------------------
def _layernorm(x, gamma, beta):
    mu = jnp.mean(x, axis=-1, keepdims=True)
    var = jnp.mean((x - mu) * (x - mu), axis=-1, keepdims=True)
    inv = jax.lax.rsqrt(var + EPS)
    return (x - mu) * inv * gamma + beta


def _softmax_last(x):
    m = jnp.max(x, axis=-1, keepdims=True)
    e = jnp.exp(x - m)
    # exact division: softmax accuracy >> EUP approx-reciprocal savings here
    return e / jnp.sum(e, axis=-1, keepdims=True)


def clip_text_encoder_kernel(
    tok_ref,    # (N, 1)  int32, batch-major fused token ids
    bias_ref,   # (N, N)  f32 additive attention bias (block-diag, cross-batch hard-masked)
    embw2_ref,  # (V+F, D) f32: rows [0,V) embedding table, rows [V,V+F) w2
    wd_ref,     # (D, WD_COLS) f32: [wq*scale | wk | wv | wo | w1]
    vec_ref,    # (8, 128) f32: packed bias / LayerNorm vectors (one per row)
    out_ref,    # (N, D)  f32
):
    # ---- embedding lookup: one-hot matmul over the fused batch ----
    tok = tok_ref[...]                                                 # (N, 1)
    vocab_iota = jax.lax.broadcasted_iota(jnp.int32, (N, V), 1)
    onehot = (tok == vocab_iota).astype(jnp.float32)                   # (N, V)
    x = jnp.dot(onehot, embw2_ref[0:V, :],
                preferred_element_type=jnp.float32)                    # (N, D)

    # ---- fused QKV projection: single (N,D)x(D,3D) matmul ----
    # 1/sqrt(DH) already baked into the q columns / q bias by the wrapper.
    qkv = (jnp.dot(x, wd_ref[:, QKV_OFF:QKV_OFF + 3 * D],
                   preferred_element_type=jnp.float32)
           + vec_ref[R_BQKV:R_BQKV + 1, 0:3 * D])                      # (N, 3D)

    # ---- multi-head self-attention (static head loop, no concatenates) ----
    bias = bias_ref[...]                                               # (N, N)
    attn = jnp.zeros((N, D), jnp.float32)
    for h in range(H):
        lo, hi = h * DH, (h + 1) * DH
        qh = qkv[:, lo:hi]                                             # (N, DH)
        kh = qkv[:, D + lo:D + hi]
        vh = qkv[:, 2 * D + lo:2 * D + hi]
        scores = jax.lax.dot_general(
            qh, kh, (((1,), (1,)), ((), ())),
            preferred_element_type=jnp.float32) + bias                 # (N, N)
        probs = _softmax_last(scores)
        ctx = jnp.dot(probs, vh, preferred_element_type=jnp.float32)   # (N, DH)
        # accumulate straight into the output projection (point-of-use wo slice)
        attn = attn + jnp.dot(ctx, wd_ref[lo:hi, WO_OFF:WO_OFF + D],
                              preferred_element_type=jnp.float32)
    attn = attn + vec_ref[R_BO:R_BO + 1, 0:D]

    x = _layernorm(x + attn,
                   vec_ref[R_LN1G:R_LN1G + 1, 0:D],
                   vec_ref[R_LN1B:R_LN1B + 1, 0:D])

    # ---- feed-forward ----
    hdn = jnp.maximum(
        jnp.dot(x, wd_ref[:, W1_OFF:W1_OFF + F],
                preferred_element_type=jnp.float32)
        + vec_ref[R_B1:R_B1 + 1, 0:F], 0.0)                            # (N, F)
    ffn = (jnp.dot(hdn, embw2_ref[V:V + F, :],
                   preferred_element_type=jnp.float32)
           + vec_ref[R_B2:R_B2 + 1, 0:D])                              # (N, D)
    x = _layernorm(x + ffn,
                   vec_ref[R_LN2G:R_LN2G + 1, 0:D],
                   vec_ref[R_LN2B:R_LN2B + 1, 0:D])

    # ---- natural-layout store: (N, D) = (16, 32), no in-kernel repack ----
    out_ref[...] = x


# ------------------------------- wrapper -------------------------------------
def make_params(key):
    ks = jax.random.split(key, 8)
    scale = 0.02
    return dict(
        emb=scale * jax.random.normal(ks[0], (V, D), jnp.float32),
        wq=scale * jax.random.normal(ks[1], (D, D), jnp.float32),
        wk=scale * jax.random.normal(ks[2], (D, D), jnp.float32),
        wv=scale * jax.random.normal(ks[3], (D, D), jnp.float32),
        wo=scale * jax.random.normal(ks[4], (D, D), jnp.float32),
        bq=jnp.zeros((1, D), jnp.float32),
        bk=jnp.zeros((1, D), jnp.float32),
        bv=jnp.zeros((1, D), jnp.float32),
        bo=jnp.zeros((1, D), jnp.float32),
        ln1g=jnp.ones((1, D), jnp.float32),
        ln1b=jnp.zeros((1, D), jnp.float32),
        w1=scale * jax.random.normal(ks[5], (D, F), jnp.float32),
        b1=jnp.zeros((1, F), jnp.float32),
        w2=scale * jax.random.normal(ks[6], (F, D), jnp.float32),
        b2=jnp.zeros((1, D), jnp.float32),
        ln2g=jnp.ones((1, D), jnp.float32),
        ln2b=jnp.zeros((1, D), jnp.float32),
    )


def _pack_params(params):
    """Pack the 17 parameter arrays into 3 slabs (wd, embw2, vec)."""
    inv_sqrt_dh = 1.0 / math.sqrt(DH)
    # score scale baked into q projection weights/bias
    wqkv = jnp.concatenate(
        [params["wq"] * inv_sqrt_dh, params["wk"], params["wv"]], axis=1)   # (D, 3D)
    bqkv = jnp.concatenate(
        [params["bq"] * inv_sqrt_dh, params["bk"], params["bv"]], axis=1)   # (1, 3D)

    wd = jnp.concatenate([wqkv, params["wo"], params["w1"]], axis=1)        # (D, 192)
    embw2 = jnp.concatenate([params["emb"], params["w2"]], axis=0)          # (V+F, D)

    vec = jnp.zeros((8, VEC_LANES), jnp.float32)
    vec = vec.at[R_BQKV, 0:3 * D].set(bqkv[0])
    vec = vec.at[R_BO, 0:D].set(params["bo"][0])
    vec = vec.at[R_LN1G, 0:D].set(params["ln1g"][0])
    vec = vec.at[R_LN1B, 0:D].set(params["ln1b"][0])
    vec = vec.at[R_B1, 0:F].set(params["b1"][0])
    vec = vec.at[R_B2, 0:D].set(params["b2"][0])
    vec = vec.at[R_LN2G, 0:D].set(params["ln2g"][0])
    vec = vec.at[R_LN2B, 0:D].set(params["ln2b"][0])
    return wd, embw2, vec


def clip_text_encoder(params, cap_tokens, cap_mask_padding, cap_mask_causal):
    """cap_tokens: (B,S) int; cap_mask_padding: (B,S) bool, True=PAD (ignore key);
    cap_mask_causal: (S,S) bool, True=masked (PyTorch attn_mask convention)."""
    # Clamp ids defensively: the one-hot gather would silently return a zero row
    # for OOB ids where PyTorch's nn.Embedding would raise.
    tok = jnp.clip(cap_tokens.astype(jnp.int32), 0, V - 1).reshape(N, 1)

    # Precompute the fused (B*S, B*S) additive attention bias outside the kernel.
    causal_keep = ~cap_mask_causal                                    # (S, S)
    pad_keep = ~cap_mask_padding                                      # (B, S)
    keep = causal_keep[None, :, :] & pad_keep[:, None, :]             # (B, S, S)
    bias_b = jnp.where(keep, 0.0, -1e9).astype(jnp.float32)           # (B, S, S)
    # Block-diagonal placement; cross-batch blocks get a strictly lower value so
    # even a fully-masked query row softmaxes uniformly over its own batch only
    # (matching the unfused reference semantics). f32-only sentinel scheme.
    bias_full = jnp.full((B, S, B, S), -2e9, jnp.float32)
    bias_full = bias_full.at[jnp.arange(B), :, jnp.arange(B), :].set(bias_b)
    bias_fused = bias_full.reshape(N, N)

    wd, embw2, vec = _pack_params(params)

    vmem = pl.BlockSpec(memory_space=pltpu.MemorySpace.VMEM)
    args = (tok, bias_fused, embw2, wd, vec)     # 5 operands total

    # No grid: total resident data is ~40 KB (<< VMEM on v5e/v6e/v7x); a grid
    # would only add per-step overhead at this size. For much larger B, add
    # grid=(B,) with dimension_semantics=("parallel",) to use both v7x TCs, and
    # for real CLIP sizes move the embedding table to HBM (pl.ANY) + DMA gather
    # and replace the fused (B*S,B*S) bias with a per-batch (S,S) bias.
    out = pl.pallas_call(
        clip_text_encoder_kernel,
        out_shape=jax.ShapeDtypeStruct((N, D), jnp.float32),
        in_specs=[vmem] * len(args),
        out_specs=pl.BlockSpec(memory_space=pltpu.MemorySpace.VMEM),
    )(*args)
    return out.reshape(B, S, D)


# ------------------------------ pure-JAX ref ----------------------------------
def reference(params, cap_tokens, cap_mask_padding, cap_mask_causal):
    x = params["emb"][cap_tokens]                                  # (B, S, D)
    keep = (~cap_mask_causal).astype(jnp.float32)[None, :, :] * \
           (~cap_mask_padding).astype(jnp.float32)[:, None, :]     # (B, S, S)
    bias = jnp.where(keep > 0.0, 0.0, -1e9)

    def ln(y, g, b):
        mu = y.mean(-1, keepdims=True)
        var = ((y - mu) ** 2).mean(-1, keepdims=True)
        return (y - mu) * jax.lax.rsqrt(var + EPS) * g + b

    q = x @ params["wq"] + params["bq"]
    k = x @ params["wk"] + params["bk"]
    v = x @ params["wv"] + params["bv"]
    qh = q.reshape(B, S, H, DH).transpose(0, 2, 1, 3)
    kh = k.reshape(B, S, H, DH).transpose(0, 2, 1, 3)
    vh = v.reshape(B, S, H, DH).transpose(0, 2, 1, 3)
    scores = jnp.einsum("bhqd,bhkd->bhqk", qh, kh) / math.sqrt(DH) + bias[:, None]
    probs = jax.nn.softmax(scores, axis=-1)
    attn = jnp.einsum("bhqk,bhkd->bhqd", probs, vh).transpose(0, 2, 1, 3).reshape(B, S, D)
    attn = attn @ params["wo"] + params["bo"]
    x = ln(x + attn, params["ln1g"], params["ln1b"])
    ffn = jnp.maximum(x @ params["w1"] + params["b1"], 0.0) @ params["w2"] + params["b2"]
    return ln(x + ffn, params["ln2g"], params["ln2b"])


# --------------------------------- main ---------------------------------------
if __name__ == "__main__":
    key = jax.random.PRNGKey(0)
    pkey, tkey = jax.random.split(key)
    params = make_params(pkey)

    cap_tokens = jax.random.randint(tkey, (B, S), 0, V)
    cap_mask_padding = jnp.zeros((B, S), bool).at[1, 6:].set(True)   # last 2 of seq 1 are PAD
    cap_mask_causal = jnp.triu(jnp.ones((S, S), bool), k=1)          # True = masked (future)

    out = clip_text_encoder(params, cap_tokens, cap_mask_padding, cap_mask_causal)
    out = jax.block_until_ready(out)

    ref = reference(params, cap_tokens, cap_mask_padding, cap_mask_causal)
    assert out.shape == (B, S, D)
    # exact softmax division restored -> tight tolerance vs. pure-JAX reference
    assert jnp.allclose(out, ref, rtol=1e-4, atol=1e-5), "mismatch vs pure-JAX reference"

    print("KERNEL_OK")
</pallas_src>

<mosaic_0001>
module attributes {stable_mosaic.version = 11 : i64} {
  func.func @clip_text_encoder_kernel(%arg0: memref<16x1xi32, #tpu.memory_space<vmem>>, %arg1: memref<16x16xf32, #tpu.memory_space<vmem>>, %arg2: memref<128x32xf32, #tpu.memory_space<vmem>>, %arg3: memref<32x192xf32, #tpu.memory_space<vmem>>, %arg4: memref<8x128xf32, #tpu.memory_space<vmem>>, %arg5: memref<16x32xf32, #tpu.memory_space<vmem>>) attributes {dimension_semantics = [], scalar_prefetch = 0 : i64, scratch_operands = 0 : i64, tpu.core_type = #tpu.core_type<tc>} {
    %c0 = arith.constant 0 : index
    %c0_0 = arith.constant 0 : index
    %0 = vector.load %arg0[%c0, %c0_0] : memref<16x1xi32, #tpu.memory_space<vmem>>, vector<16x1xi32>
    %1 = tpu.iota {dimensions = array<i32: 1>} : vector<16x64xi32>
    %2 = vector.broadcast %0 : vector<16x1xi32> to vector<16x64xi32>
    %3 = arith.cmpi eq, %2, %1 : vector<16x64xi32>
    %4 = arith.extui %3 : vector<16x64xi1> to vector<16x64xi32>
    %5 = arith.sitofp %4 : vector<16x64xi32> to vector<16x64xf32>
    %c0_1 = arith.constant 0 : index
    %c0_2 = arith.constant 0 : index
    %6 = vector.load %arg2[%c0_1, %c0_2] : memref<128x32xf32, #tpu.memory_space<vmem>>, vector<64x32xf32>
    %cst = arith.constant dense<0.000000e+00> : vector<16x32xf32>
    %7 = tpu.matmul %5, %6, %cst {dimension_numbers = #tpu.dot_dimension_numbers<[1], [0], [0], [1], [0, 0, 1, 1], [], []>} : vector<16x64xf32>, vector<64x32xf32>, vector<16x32xf32> -> vector<16x32xf32>
    %c0_3 = arith.constant 0 : index
    %c0_4 = arith.constant 0 : index
    %8 = vector.load %arg3[%c0_3, %c0_4] : memref<32x192xf32, #tpu.memory_space<vmem>>, vector<32x96xf32>
    %cst_5 = arith.constant dense<0.000000e+00> : vector<16x96xf32>
    %9 = tpu.matmul %7, %8, %cst_5 {dimension_numbers = #tpu.dot_dimension_numbers<[1], [0], [0], [1], [0, 0, 1, 1], [], []>} : vector<16x32xf32>, vector<32x96xf32>, vector<16x96xf32> -> vector<16x96xf32>
    %c0_6 = arith.constant 0 : index
    %c0_7 = arith.constant 0 : index
    %10 = vector.load %arg4[%c0_6, %c0_7] : memref<8x128xf32, #tpu.memory_space<vmem>>, vector<1x96xf32>
    %11 = vector.broadcast %10 : vector<1x96xf32> to vector<16x96xf32>
    %12 = arith.addf %9, %11 : vector<16x96xf32>
    %c0_8 = arith.constant 0 : index
    %c0_9 = arith.constant 0 : index
    %13 = vector.load %arg1[%c0_8, %c0_9] : memref<16x16xf32, #tpu.memory_space<vmem>>, vector<16x16xf32>
    %cst_10 = arith.constant 0.000000e+00 : f32
    %14 = vector.broadcast %cst_10 : f32 to vector<16x32xf32>
    %15 = vector.extract_strided_slice %12 {offsets = [0, 0], sizes = [16, 8], strides = [1, 1]} : vector<16x96xf32> to vector<16x8xf32>
    %16 = vector.extract_strided_slice %12 {offsets = [0, 32], sizes = [16, 8], strides = [1, 1]} : vector<16x96xf32> to vector<16x8xf32>
    %17 = vector.extract_strided_slice %12 {offsets = [0, 64], sizes = [16, 8], strides = [1, 1]} : vector<16x96xf32> to vector<16x8xf32>
    %cst_11 = arith.constant dense<0.000000e+00> : vector<16x16xf32>
    %18 = tpu.matmul %15, %16, %cst_11 {dimension_numbers = #tpu.dot_dimension_numbers<[1], [1], [0], [0], [0, 0, 1, 0], [], []>} : vector<16x8xf32>, vector<16x8xf32>, vector<16x16xf32> -> vector<16x16xf32>
    %19 = arith.addf %18, %13 : vector<16x16xf32>
    %cst_12 = arith.constant dense<0xFF800000> : vector<16xf32>
    %20 = vector.multi_reduction <maximumf>, %19, %cst_12 [1] : vector<16x16xf32> to vector<16xf32>
    %21 = vector.shape_cast %20 : vector<16xf32> to vector<16x1xf32>
    %22 = vector.broadcast %21 : vector<16x1xf32> to vector<16x16xf32>
    %23 = arith.subf %19, %22 : vector<16x16xf32>
    %24 = math.exp %23 : vector<16x16xf32>
    %cst_13 = arith.constant dense<0.000000e+00> : vector<16xf32>
    %25 = vector.multi_reduction <add>, %24, %cst_13 [1] : vector<16x16xf32> to vector<16xf32>
    %26 = vector.shape_cast %25 : vector<16xf32> to vector<16x1xf32>
    %27 = vector.broadcast %26 : vector<16x1xf32> to vector<16x16xf32>
    %28 = arith.divf %24, %27 : vector<16x16xf32>
    %cst_14 = arith.constant dense<0.000000e+00> : vector<16x8xf32>
    %29 = tpu.matmul %28, %17, %cst_14 {dimension_numbers = #tpu.dot_dimension_numbers<[1], [0], [0], [1], [0, 0, 1, 1], [], []>} : vector<16x16xf32>, vector<16x8xf32>, vector<16x8xf32> -> vector<16x8xf32>
    %c0_15 = arith.constant 0 : index
    %c96 = arith.constant 96 : index
    %30 = vector.load %arg3[%c0_15, %c96] : memref<32x192xf32, #tpu.memory_space<vmem>>, vector<8x32xf32>
    %cst_16 = arith.constant dense<0.000000e+00> : vector<16x32xf32>
    %31 = tpu.matmul %29, %30, %cst_16 {dimension_numbers = #tpu.dot_dimension_numbers<[1], [0], [0], [1], [0, 0, 1, 1], [], []>} : vector<16x8xf32>, vector<8x32xf32>, vector<16x32xf32> -> vector<16x32xf32>
    %32 = arith.addf %14, %31 : vector<16x32xf32>
    %33 = vector.extract_strided_slice %12 {offsets = [0, 8], sizes = [16, 8], strides = [1, 1]} : vector<16x96xf32> to vector<16x8xf32>
    %34 = vector.extract_strided_slice %12 {offsets = [0, 40], sizes = [16, 8], strides = [1, 1]} : vector<16x96xf32> to vector<16x8xf32>
    %35 = vector.extract_strided_slice %12 {offsets = [0, 72], sizes = [16, 8], strides = [1, 1]} : vector<16x96xf32> to vector<16x8xf32>
    %cst_17 = arith.constant dense<0.000000e+00> : vector<16x16xf32>
    %36 = tpu.matmul %33, %34, %cst_17 {dimension_numbers = #tpu.dot_dimension_numbers<[1], [1], [0], [0], [0, 0, 1, 0], [], []>} : vector<16x8xf32>, vector<16x8xf32>, vector<16x16xf32> -> vector<16x16xf32>
    %37 = arith.addf %36, %13 : vector<16x16xf32>
    %cst_18 = arith.constant dense<0xFF800000> : vector<16xf32>
    %38 = vector.multi_reduction <maximumf>, %37, %cst_18 [1] : vector<16x16xf32> to vector<16xf32>
    %39 = vector.shape_cast %38 : vector<16xf32> to vector<16x1xf32>
    %40 = vector.broadcast %39 : vector<16x1xf32> to vector<16x16xf32>
    %41 = arith.subf %37, %40 : vector<16x16xf32>
    %42 = math.exp %41 : vector<16x16xf32>
    %cst_19 = arith.constant dense<0.000000e+00> : vector<16xf32>
    %43 = vector.multi_reduction <add>, %42, %cst_19 [1] : vector<16x16xf32> to vector<16xf32>
    %44 = vector.shape_cast %43 : vector<16xf32> to vector<16x1xf32>
    %45 = vector.broadcast %44 : vector<16x1xf32> to vector<16x16xf32>
    %46 = arith.divf %42, %45 : vector<16x16xf32>
    %cst_20 = arith.constant dense<0.000000e+00> : vector<16x8xf32>
    %47 = tpu.matmul %46, %35, %cst_20 {dimension_numbers = #tpu.dot_dimension_numbers<[1], [0], [0], [1], [0, 0, 1, 1], [], []>} : vector<16x16xf32>, vector<16x8xf32>, vector<16x8xf32> -> vector<16x8xf32>
    %c8 = arith.constant 8 : index
    %c96_21 = arith.constant 96 : index
    %48 = vector.load %arg3[%c8, %c96_21] : memref<32x192xf32, #tpu.memory_space<vmem>>, vector<8x32xf32>
    %cst_22 = arith.constant dense<0.000000e+00> : vector<16x32xf32>
    %49 = tpu.matmul %47, %48, %cst_22 {dimension_numbers = #tpu.dot_dimension_numbers<[1], [0], [0], [1], [0, 0, 1, 1], [], []>} : vector<16x8xf32>, vector<8x32xf32>, vector<16x32xf32> -> vector<16x32xf32>
    %50 = arith.addf %32, %49 : vector<16x32xf32>
    %51 = vector.extract_strided_slice %12 {offsets = [0, 16], sizes = [16, 8], strides = [1, 1]} : vector<16x96xf32> to vector<16x8xf32>
    %52 = vector.extract_strided_slice %12 {offsets = [0, 48], sizes = [16, 8], strides = [1, 1]} : vector<16x96xf32> to vector<16x8xf32>
    %53 = vector.extract_strided_slice %12 {offsets = [0, 80], sizes = [16, 8], strides = [1, 1]} : vector<16x96xf32> to vector<16x8xf32>
    %cst_23 = arith.constant dense<0.000000e+00> : vector<16x16xf32>
    %54 = tpu.matmul %51, %52, %cst_23 {dimension_numbers = #tpu.dot_dimension_numbers<[1], [1], [0], [0], [0, 0, 1, 0], [], []>} : vector<16x8xf32>, vector<16x8xf32>, vector<16x16xf32> -> vector<16x16xf32>
    %55 = arith.addf %54, %13 : vector<16x16xf32>
    %cst_24 = arith.constant dense<0xFF800000> : vector<16xf32>
    %56 = vector.multi_reduction <maximumf>, %55, %cst_24 [1] : vector<16x16xf32> to vector<16xf32>
    %57 = vector.shape_cast %56 : vector<16xf32> to vector<16x1xf32>
    %58 = vector.broadcast %57 : vector<16x1xf32> to vector<16x16xf32>
    %59 = arith.subf %55, %58 : vector<16x16xf32>
    %60 = math.exp %59 : vector<16x16xf32>
    %cst_25 = arith.constant dense<0.000000e+00> : vector<16xf32>
    %61 = vector.multi_reduction <add>, %60, %cst_25 [1] : vector<16x16xf32> to vector<16xf32>
    %62 = vector.shape_cast %61 : vector<16xf32> to vector<16x1xf32>
    %63 = vector.broadcast %62 : vector<16x1xf32> to vector<16x16xf32>
    %64 = arith.divf %60, %63 : vector<16x16xf32>
    %cst_26 = arith.constant dense<0.000000e+00> : vector<16x8xf32>
    %65 = tpu.matmul %64, %53, %cst_26 {dimension_numbers = #tpu.dot_dimension_numbers<[1], [0], [0], [1], [0, 0, 1, 1], [], []>} : vector<16x16xf32>, vector<16x8xf32>, vector<16x8xf32> -> vector<16x8xf32>
    %c16 = arith.constant 16 : index
    %c96_27 = arith.constant 96 : index
    %66 = vector.load %arg3[%c16, %c96_27] : memref<32x192xf32, #tpu.memory_space<vmem>>, vector<8x32xf32>
    %cst_28 = arith.constant dense<0.000000e+00> : vector<16x32xf32>
    %67 = tpu.matmul %65, %66, %cst_28 {dimension_numbers = #tpu.dot_dimension_numbers<[1], [0], [0], [1], [0, 0, 1, 1], [], []>} : vector<16x8xf32>, vector<8x32xf32>, vector<16x32xf32> -> vector<16x32xf32>
    %68 = arith.addf %50, %67 : vector<16x32xf32>
    %69 = vector.extract_strided_slice %12 {offsets = [0, 24], sizes = [16, 8], strides = [1, 1]} : vector<16x96xf32> to vector<16x8xf32>
    %70 = vector.extract_strided_slice %12 {offsets = [0, 56], sizes = [16, 8], strides = [1, 1]} : vector<16x96xf32> to vector<16x8xf32>
    %71 = vector.extract_strided_slice %12 {offsets = [0, 88], sizes = [16, 8], strides = [1, 1]} : vector<16x96xf32> to vector<16x8xf32>
    %cst_29 = arith.constant dense<0.000000e+00> : vector<16x16xf32>
    %72 = tpu.matmul %69, %70, %cst_29 {dimension_numbers = #tpu.dot_dimension_numbers<[1], [1], [0], [0], [0, 0, 1, 0], [], []>} : vector<16x8xf32>, vector<16x8xf32>, vector<16x16xf32> -> vector<16x16xf32>
    %73 = arith.addf %72, %13 : vector<16x16xf32>
    %cst_30 = arith.constant dense<0xFF800000> : vector<16xf32>
    %74 = vector.multi_reduction <maximumf>, %73, %cst_30 [1] : vector<16x16xf32> to vector<16xf32>
    %75 = vector.shape_cast %74 : vector<16xf32> to vector<16x1xf32>
    %76 = vector.broadcast %75 : vector<16x1xf32> to vector<16x16xf32>
    %77 = arith.subf %73, %76 : vector<16x16xf32>
    %78 = math.exp %77 : vector<16x16xf32>
    %cst_31 = arith.constant dense<0.000000e+00> : vector<16xf32>
    %79 = vector.multi_reduction <add>, %78, %cst_31 [1] : vector<16x16xf32> to vector<16xf32>
    %80 = vector.shape_cast %79 : vector<16xf32> to vector<16x1xf32>
    %81 = vector.broadcast %80 : vector<16x1xf32> to vector<16x16xf32>
    %82 = arith.divf %78, %81 : vector<16x16xf32>
    %cst_32 = arith.constant dense<0.000000e+00> : vector<16x8xf32>
    %83 = tpu.matmul %82, %71, %cst_32 {dimension_numbers = #tpu.dot_dimension_numbers<[1], [0], [0], [1], [0, 0, 1, 1], [], []>} : vector<16x16xf32>, vector<16x8xf32>, vector<16x8xf32> -> vector<16x8xf32>
    %c24 = arith.constant 24 : index
    %c96_33 = arith.constant 96 : index
    %84 = vector.load %arg3[%c24, %c96_33] : memref<32x192xf32, #tpu.memory_space<vmem>>, vector<8x32xf32>
    %cst_34 = arith.constant dense<0.000000e+00> : vector<16x32xf32>
    %85 = tpu.matmul %83, %84, %cst_34 {dimension_numbers = #tpu.dot_dimension_numbers<[1], [0], [0], [1], [0, 0, 1, 1], [], []>} : vector<16x8xf32>, vector<8x32xf32>, vector<16x32xf32> -> vector<16x32xf32>
    %86 = arith.addf %68, %85 : vector<16x32xf32>
    %c1 = arith.constant 1 : index
    %c0_35 = arith.constant 0 : index
    %87 = vector.load %arg4[%c1, %c0_35] : memref<8x128xf32, #tpu.memory_space<vmem>>, vector<1x32xf32>
    %88 = vector.broadcast %87 : vector<1x32xf32> to vector<16x32xf32>
    %89 = arith.addf %86, %88 : vector<16x32xf32>
    %90 = arith.addf %7, %89 : vector<16x32xf32>
    %c2 = arith.constant 2 : index
    %c0_36 = arith.constant 0 : index
    %91 = vector.load %arg4[%c2, %c0_36] : memref<8x128xf32, #tpu.memory_space<vmem>>, vector<1x32xf32>
    %c3 = arith.constant 3 : index
    %c0_37 = arith.constant 0 : index
    %92 = vector.load %arg4[%c3, %c0_37] : memref<8x128xf32, #tpu.memory_space<vmem>>, vector<1x32xf32>
    %cst_38 = arith.constant dense<0.000000e+00> : vector<16xf32>
    %93 = vector.multi_reduction <add>, %90, %cst_38 [1] : vector<16x32xf32> to vector<16xf32>
    %94 = vector.shape_cast %93 : vector<16xf32> to vector<16x1xf32>
    %cst_39 = arith.constant 3.200000e+01 : f32
    %95 = vector.broadcast %cst_39 : f32 to vector<16x1xf32>
    %96 = arith.divf %94, %95 : vector<16x1xf32>
    %97 = vector.broadcast %96 : vector<16x1xf32> to vector<16x32xf32>
    %98 = arith.subf %90, %97 : vector<16x32xf32>
    %99 = vector.broadcast %96 : vector<16x1xf32> to vector<16x32xf32>
    %100 = arith.subf %90, %99 : vector<16x32xf32>
    %101 = arith.mulf %98, %100 : vector<16x32xf32>
    %cst_40 = arith.constant dense<0.000000e+00> : vector<16xf32>
    %102 = vector.multi_reduction <add>, %101, %cst_40 [1] : vector<16x32xf32> to vector<16xf32>
    %103 = vector.shape_cast %102 : vector<16xf32> to vector<16x1xf32>
    %cst_41 = arith.constant 3.200000e+01 : f32
    %104 = vector.broadcast %cst_41 : f32 to vector<16x1xf32>
    %105 = arith.divf %103, %104 : vector<16x1xf32>
    %cst_42 = arith.constant 9.99999974E-6 : f32
    %106 = vector.broadcast %cst_42 : f32 to vector<16x1xf32>
    %107 = arith.addf %105, %106 : vector<16x1xf32>
    %108 = math.rsqrt %107 : vector<16x1xf32>
    %109 = vector.broadcast %96 : vector<16x1xf32> to vector<16x32xf32>
    %110 = arith.subf %90, %109 : vector<16x32xf32>
    %111 = vector.broadcast %108 : vector<16x1xf32> to vector<16x32xf32>
    %112 = arith.mulf %110, %111 : vector<16x32xf32>
    %113 = vector.broadcast %91 : vector<1x32xf32> to vector<16x32xf32>
    %114 = arith.mulf %112, %113 : vector<16x32xf32>
    %115 = vector.broadcast %92 : vector<1x32xf32> to vector<16x32xf32>
    %116 = arith.addf %114, %115 : vector<16x32xf32>
    %c0_43 = arith.constant 0 : index
    %c128 = arith.constant 128 : index
    %117 = vector.load %arg3[%c0_43, %c128] : memref<32x192xf32, #tpu.memory_space<vmem>>, vector<32x64xf32>
    %cst_44 = arith.constant dense<0.000000e+00> : vector<16x64xf32>
    %118 = tpu.matmul %116, %117, %cst_44 {dimension_numbers = #tpu.dot_dimension_numbers<[1], [0], [0], [1], [0, 0, 1, 1], [], []>} : vector<16x32xf32>, vector<32x64xf32>, vector<16x64xf32> -> vector<16x64xf32>
    %c4 = arith.constant 4 : index
    %c0_45 = arith.constant 0 : index
    %119 = vector.load %arg4[%c4, %c0_45] : memref<8x128xf32, #tpu.memory_space<vmem>>, vector<1x64xf32>
    %120 = vector.broadcast %119 : vector<1x64xf32> to vector<16x64xf32>
    %121 = arith.addf %118, %120 : vector<16x64xf32>
    %cst_46 = arith.constant 0.000000e+00 : f32
    %122 = vector.broadcast %cst_46 : f32 to vector<16x64xf32>
    %123 = arith.maximumf %121, %122 : vector<16x64xf32>
    %c64 = arith.constant 64 : index
    %c0_47 = arith.constant 0 : index
    %124 = vector.load %arg2[%c64, %c0_47] : memref<128x32xf32, #tpu.memory_space<vmem>>, vector<64x32xf32>
    %cst_48 = arith.constant dense<0.000000e+00> : vector<16x32xf32>
    %125 = tpu.matmul %123, %124, %cst_48 {dimension_numbers = #tpu.dot_dimension_numbers<[1], [0], [0], [1], [0, 0, 1, 1], [], []>} : vector<16x64xf32>, vector<64x32xf32>, vector<16x32xf32> -> vector<16x32xf32>
    %c5 = arith.constant 5 : index
    %c0_49 = arith.constant 0 : index
    %126 = vector.load %arg4[%c5, %c0_49] : memref<8x128xf32, #tpu.memory_space<vmem>>, vector<1x32xf32>
    %127 = vector.broadcast %126 : vector<1x32xf32> to vector<16x32xf32>
    %128 = arith.addf %125, %127 : vector<16x32xf32>
    %129 = arith.addf %116, %128 : vector<16x32xf32>
    %c6 = arith.constant 6 : index
    %c0_50 = arith.constant 0 : index
    %130 = vector.load %arg4[%c6, %c0_50] : memref<8x128xf32, #tpu.memory_space<vmem>>, vector<1x32xf32>
    %c7 = arith.constant 7 : index
    %c0_51 = arith.constant 0 : index
    %131 = vector.load %arg4[%c7, %c0_51] : memref<8x128xf32, #tpu.memory_space<vmem>>, vector<1x32xf32>
    %cst_52 = arith.constant dense<0.000000e+00> : vector<16xf32>
    %132 = vector.multi_reduction <add>, %129, %cst_52 [1] : vector<16x32xf32> to vector<16xf32>
    %133 = vector.shape_cast %132 : vector<16xf32> to vector<16x1xf32>
    %cst_53 = arith.constant 3.200000e+01 : f32
    %134 = vector.broadcast %cst_53 : f32 to vector<16x1xf32>
    %135 = arith.divf %133, %134 : vector<16x1xf32>
    %136 = vector.broadcast %135 : vector<16x1xf32> to vector<16x32xf32>
    %137 = arith.subf %129, %136 : vector<16x32xf32>
    %138 = vector.broadcast %135 : vector<16x1xf32> to vector<16x32xf32>
    %139 = arith.subf %129, %138 : vector<16x32xf32>
    %140 = arith.mulf %137, %139 : vector<16x32xf32>
    %cst_54 = arith.constant dense<0.000000e+00> : vector<16xf32>
    %141 = vector.multi_reduction <add>, %140, %cst_54 [1] : vector<16x32xf32> to vector<16xf32>
    %142 = vector.shape_cast %141 : vector<16xf32> to vector<16x1xf32>
    %cst_55 = arith.constant 3.200000e+01 : f32
    %143 = vector.broadcast %cst_55 : f32 to vector<16x1xf32>
    %144 = arith.divf %142, %143 : vector<16x1xf32>
    %cst_56 = arith.constant 9.99999974E-6 : f32
    %145 = vector.broadcast %cst_56 : f32 to vector<16x1xf32>
    %146 = arith.addf %144, %145 : vector<16x1xf32>
    %147 = math.rsqrt %146 : vector<16x1xf32>
    %148 = vector.broadcast %135 : vector<16x1xf32> to vector<16x32xf32>
    %149 = arith.subf %129, %148 : vector<16x32xf32>
    %150 = vector.broadcast %147 : vector<16x1xf32> to vector<16x32xf32>
    %151 = arith.mulf %149, %150 : vector<16x32xf32>
    %152 = vector.broadcast %130 : vector<1x32xf32> to vector<16x32xf32>
    %153 = arith.mulf %151, %152 : vector<16x32xf32>
    %154 = vector.broadcast %131 : vector<1x32xf32> to vector<16x32xf32>
    %155 = arith.addf %153, %154 : vector<16x32xf32>
    %c0_57 = arith.constant 0 : index
    %c0_58 = arith.constant 0 : index
    %156 = vector.load %arg5[%c0_57, %c0_58] : memref<16x32xf32, #tpu.memory_space<vmem>>, vector<16x32xf32>
    tpu.vector_store %arg5[%c0_57, %c0_58], %155 {strides = array<i32>} : memref<16x32xf32, #tpu.memory_space<vmem>>, vector<16x32xf32>,
    return
  }
}

</mosaic_0001>

<llo_original>
// kernel: tpu_custom_call.1
$region0: #{tpu_custom_call.1}
  #allocation0 [shape = 'u32[]', space=smem, size = 0x4, offset = 0x4, fixed_abs, tag = 'smem constant byte address 0x4 - core index']
  #allocation1 [shape = 'u32[144,128]{1,0:T(1,128)}', space=vmem, size = 0x12000, scoped, tag = 'internal scratch']
  %s0 = inlined_call_operand.vmem [shape: s32[16,1], index: 0, kind: input, shape index: {}]
  %s1 = inlined_call_operand.vmem [shape: f32[16,16], index: 1, kind: input, shape index: {}]
  %s2 = inlined_call_operand.vmem [shape: f32[128,32], index: 2, kind: input, shape index: {}]
  %s3 = inlined_call_operand.vmem [shape: f32[32,192], index: 3, kind: input, shape index: {}]
  %s4 = inlined_call_operand.vmem [shape: f32[8,128], index: 4, kind: input, shape index: {}]
  %s5 = inlined_call_operand.hbm [shape: f32[16,32], index: 5, kind: output, shape index: {}]
  %s6 = sld [smem:[#allocation0]]
  $region30: #{tpu_custom_call.1} parent=0
    _
  %s8 = ssub.s32 1, %s6
  %s9 = scalar_select 0, %s8, %s6
  $region1: #{tpu_custom_call.1} parent=0
    #allocation2 [shape = 'u8[8192]{0}', space=vmem, size = 0x2000, scoped, tag = 'output window, operand 0, single buffered']
    #allocation3 [shape = 's32[1]{0}', space=sflag, size = 0x4, scoped, tag = 'scoped memory for tpu_custom_call.1']
    %10 = vsyncpa [#allocation3], 0
    // Predicated region
    $region2: #{tpu_custom_call.1} parent=1 // pred_check
      _
    $region3: #{tpu_custom_call.1} parent=1 // pred_check_branch
      %12 = sbr.rel (0) target = $region5
    $region4: #{tpu_custom_call.1} parent=1 // pred_region
      _
    $region5: #{tpu_custom_call.1} parent=1 // pred_fallthru
      _
    // Predicated region
    $region6: #{tpu_custom_call.1} parent=1 // pred_check
      _
    $region7: #{tpu_custom_call.1} parent=1 // pred_check_branch
      %14 = sbr.rel (0) target = $region9
    $region8: #{tpu_custom_call.1} parent=1 // pred_region
      _
    $region9: #{tpu_custom_call.1} parent=1 // pred_fallthru
      _
    // Predicated region
    $region10: #{tpu_custom_call.1} parent=1 // pred_check
      _
    $region11: #{tpu_custom_call.1} parent=1 // pred_check_branch
      %16 = sbr.rel (0) target = $region13
    $region12: #{tpu_custom_call.1} parent=1 // pred_region
      _
    $region13: #{tpu_custom_call.1} parent=1 // pred_fallthru
      _
    // Predicated region
    $region14: #{tpu_custom_call.1} parent=1 // pred_check
      _
    $region15: #{tpu_custom_call.1} parent=1 // pred_check_branch
      %18 = sbr.rel (0) target = $region17
    $region16: #{tpu_custom_call.1} parent=1 // pred_region
      _
    $region17: #{tpu_custom_call.1} parent=1 // pred_fallthru
      _
    // Predicated region
    $region18: #{tpu_custom_call.1} parent=1 // pred_check
      _
    $region19: #{tpu_custom_call.1} parent=1 // pred_check_branch
      %20 = sbr.rel (0) target = $region21
    $region20: #{tpu_custom_call.1} parent=1 // pred_region
      _
    $region21: #{tpu_custom_call.1} parent=1 // pred_fallthru
      _
    %v21 = vld [vmem:[%s0] sm:$0xff]
    %v22 = vld [vmem:[%s0 + $0x8] sm:$0xff]
    %v23 = vlaneseq
    %v24 = vand.u32 %v23, 127
    %25 = vset.pattern.permute.xlu0 0
    %26 = vperm.xlu0 %25, %v21
    %v27 = vpop.permute.xlu0 %26
    %28 = vset.pattern.permute.xlu0 0
    %29 = vperm.xlu0 %28, %v22
    %v30 = vpop.permute.xlu0 %29
    %vm31 = vcmp.eq.s32.totalorder %v27, %v24
    %vm32 = vcmp.eq.s32.totalorder %v30, %v24
    %v33 = vsel %vm31, 1, 0
    %v34 = vsel %vm32, 1, 0
    %v35 = vcvt.s32.f32 %v33
    %v36 = vcvt.s32.f32 %v34
    %v37 = vld [vmem:[%s2] sm:$0xff]
    %v38 = vld [vmem:[%s2 + $0x8] sm:$0xff]
    %v39 = vld [vmem:[%s2 + $0x10] sm:$0xff]
    %v40 = vld [vmem:[%s2 + $0x18] sm:$0xff]
    %v41 = vld [vmem:[%s2 + $0x20] sm:$0xff]
    %v42 = vld [vmem:[%s2 + $0x28] sm:$0xff]
    %v43 = vld [vmem:[%s2 + $0x30] sm:$0xff]
    %v44 = vld [vmem:[%s2 + $0x38] sm:$0xff]
    %vm45 = vcmask 523264
    %v47 = vsel %vm45, %v35, 0
    %v50 = vsel %vm45, %v36, 0
    %52 = vmatprep.subr.mxu0 0.0
    %53 = vmatpush1.msra.mxu0 %v37
    %54 = vmatprep.subr.mxu0 0.0
    %55 = vmatpush1.msra.mxu0 %v38
    %56 = vmatprep.subr.mxu0 0.0
    %57 = vmatpush1.msra.mxu0 %v39
    %58 = vmatprep.subr.mxu0 0.0
    %59 = vmatpush1.msra.mxu0 %v40
    %60 = vmatprep.subr.mxu0 0.0
    %61 = vmatpush1.msra.mxu0 %v41
    %62 = vmatprep.subr.mxu0 0.0
    %63 = vmatpush1.msra.mxu0 %v42
    %64 = vmatprep.subr.mxu0 0.0
    %65 = vmatpush1.msra.mxu0 %v43
    %66 = vmatprep.subr.mxu0 0.0
    %67 = vmatpush1.msra.mxu0 %v44
    %68 = vmatprep.subr.mxu0 0.0
    %69 = vmatpush1.msra.mxu0 0.0
    %70 = vmatprep.subr.mxu0 0.0
    %71 = vmatpush1.msra.mxu0 0.0
    %72 = vmatprep.subr.mxu0 0.0
    %73 = vmatpush1.msra.mxu0 0.0
    %74 = vmatprep.subr.mxu0 0.0
    %75 = vmatpush1.msra.mxu0 0.0
    %76 = vmatprep.subr.mxu0 0.0
    %77 = vmatpush1.msra.mxu0 0.0
    %78 = vmatprep.subr.mxu0 0.0
    %79 = vmatpush1.msra.mxu0 0.0
    %80 = vmatprep.subr.mxu0 0.0
    %81 = vmatpush1.msra.mxu0 0.0
    %82 = vmatprep.subr.mxu0 0.0
    %83 = vmatpush1.msra.mxu0 0.0
    %84 = vmatprep.subr.mxu0 0.0
    %85 = vmatpush1.msra.mxu0 0.0
    %86 = vmatprep.subr.mxu0 0.0
    %87 = vmatpush1.msra.mxu0 0.0
    %88 = vmatprep.subr.mxu0 0.0
    %89 = vmatpush1.msra.mxu0 0.0
    %90 = vmatprep.subr.mxu0 0.0
    %91 = vmatpush1.msra.mxu0 0.0
    %92 = vmatprep.subr.mxu0 0.0
    %93 = vmatpush1.msra.mxu0 0.0
    %94 = vmatprep.subr.mxu0 0.0
    %95 = vmatpush1.msra.mxu0 0.0
    %96 = vmatprep.subr.mxu0 0.0
    %97 = vmatpush1.msra.mxu0 0.0
    %98 = vmatprep.subr.mxu0 0.0
    %99 = vmatpush1.msra.mxu0 0.0
    %100 = vmatprep.subr.mxu0 0.0
    %101 = vmatpush1.msra.mxu0 0.0
    %102 = vmatprep.subr.mxu0 0.0
    %103 = vmatpush1.msra.mxu0 0.0
    %104 = vmatprep.subr.mxu0 0.0
    %105 = vmatpush1.msra.mxu0 0.0
    %106 = vmatprep.subr.mxu0 0.0
    %107 = vmatpush1.msra.mxu0 0.0
    %108 = vmatprep.subr.mxu0 0.0
    %109 = vmatpush1.msra.mxu0 0.0
    %110 = vmatprep.subr.mxu0 0.0
    %111 = vmatpush1.msra.mxu0 0.0
    %112 = vmatprep.subr.mxu0 0.0
    %113 = vmatpush1.msra.mxu0 0.0
    %114 = vmatprep.subr.mxu0 0.0
    %115 = vmatpush1.msra.mxu0 0.0
    %116 = vmatprep.mubr.f32.mxu0 0.0
    %117 = vmatmul.mubr.f32.gmra.mrb[0].mxu0 %v47
    %v118 = vpop.f32.mrb[0].mxu0
    %v119 = vadd.f32 0.0, %v118
    %v120 = vpop.f32.mrb[0].mxu0
    %121 = vmatprep.mubr.f32.mxu0 0.0
    %122 = vmatmul.mubr.f32.gmra.mrb[0].mxu0 %v50
    %v123 = vpop.f32.mrb[0].mxu0
    %v124 = vadd.f32 0.0, %v123
    %v125 = vpop.f32.mrb[0].mxu0
    %126 = vdwg.mxu0
    %v127 = vld [vmem:[%s3] sm:$0xff]
    %v128 = vld [vmem:[%s3 + $0x10] sm:$0xff]
    %v129 = vld [vmem:[%s3 + $0x20] sm:$0xff]
    %v130 = vld [vmem:[%s3 + $0x30] sm:$0xff]
    %v131 = vld [vmem:[%s4] sm:$0x1]
    %v132 = vlaneseq
    %v133 = vshrl.u32 %v132, 7
    %v134 = vsub.s32 0, %v133
    %v135 = vrot.slane %v131, %v134
    %vm136 = vcmask 261120
    %v138 = vsel %vm136, %v119, 0
    %v141 = vsel %vm136, %v124, 0
    %143 = vmatprep.subr.mxu0 0.0
    %144 = vmatpush1.msra.mxu0 %v127
    %145 = vmatprep.subr.mxu0 0.0
    %146 = vmatpush1.msra.mxu0 %v128
    %147 = vmatprep.subr.mxu0 0.0
    %148 = vmatpush1.msra.mxu0 %v129
    %149 = vmatprep.subr.mxu0 0.0
    %150 = vmatpush1.msra.mxu0 %v130
    %151 = vmatprep.subr.mxu0 0.0
    %152 = vmatpush1.msra.mxu0 0.0
    %153 = vmatprep.subr.mxu0 0.0
    %154 = vmatpush1.msra.mxu0 0.0
    %155 = vmatprep.subr.mxu0 0.0
    %156 = vmatpush1.msra.mxu0 0.0
    %157 = vmatprep.subr.mxu0 0.0
    %158 = vmatpush1.msra.mxu0 0.0
    %159 = vmatprep.subr.mxu0 0.0
    %160 = vmatpush1.msra.mxu0 0.0
    %161 = vmatprep.subr.mxu0 0.0
    %162 = vmatpush1.msra.mxu0 0.0
    %163 = vmatprep.subr.mxu0 0.0
    %164 = vmatpush1.msra.mxu0 0.0
    %165 = vmatprep.subr.mxu0 0.0
    %166 = vmatpush1.msra.mxu0 0.0
    %167 = vmatprep.subr.mxu0 0.0
    %168 = vmatpush1.msra.mxu0 0.0
    %169 = vmatprep.subr.mxu0 0.0
    %170 = vmatpush1.msra.mxu0 0.0
    %171 = vmatprep.subr.mxu0 0.0
    %172 = vmatpush1.msra.mxu0 0.0
    %173 = vmatprep.subr.mxu0 0.0
    %174 = vmatpush1.msra.mxu0 0.0
    %175 = vmatprep.subr.mxu0 0.0
    %176 = vmatpush1.msra.mxu0 0.0
    %177 = vmatprep.subr.mxu0 0.0
    %178 = vmatpush1.msra.mxu0 0.0
    %179 = vmatprep.subr.mxu0 0.0
    %180 = vmatpush1.msra.mxu0 0.0
    %181 = vmatprep.subr.mxu0 0.0
    %182 = vmatpush1.msra.mxu0 0.0
    %183 = vmatprep.subr.mxu0 0.0
    %184 = vmatpush1.msra.mxu0 0.0
    %185 = vmatprep.subr.mxu0 0.0
    %186 = vmatpush1.msra.mxu0 0.0
    %187 = vmatprep.subr.mxu0 0.0
    %188 = vmatpush1.msra.mxu0 0.0
    %189 = vmatprep.subr.mxu0 0.0
    %190 = vmatpush1.msra.mxu0 0.0
    %191 = vmatprep.subr.mxu0 0.0
    %192 = vmatpush1.msra.mxu0 0.0
    %193 = vmatprep.subr.mxu0 0.0
    %194 = vmatpush1.msra.mxu0 0.0
    %195 = vmatprep.subr.mxu0 0.0
    %196 = vmatpush1.msra.mxu0 0.0
    %197 = vmatprep.subr.mxu0 0.0
    %198 = vmatpush1.msra.mxu0 0.0
    %199 = vmatprep.subr.mxu0 0.0
    %200 = vmatpush1.msra.mxu0 0.0
    %201 = vmatprep.subr.mxu0 0.0
    %202 = vmatpush1.msra.mxu0 0.0
    %203 = vmatprep.subr.mxu0 0.0
    %204 = vmatpush1.msra.mxu0 0.0
    %205 = vmatprep.subr.mxu0 0.0
    %206 = vmatpush1.msra.mxu0 0.0
    %207 = vmatprep.mubr.f32.mxu0 0.0
    %208 = vmatmul.mubr.f32.gmra.mrb[0].mxu0 %v138
    %v209 = vpop.f32.mrb[0].mxu0
    %v210 = vadd.f32 %v135, %v209
    %v211 = vpop.f32.mrb[0].mxu0
    %212 = vmatprep.mubr.f32.mxu0 0.0
    %213 = vmatmul.mubr.f32.gmra.mrb[0].mxu0 %v141
    %v214 = vpop.f32.mrb[0].mxu0
    %v215 = vadd.f32 %v135, %v214
    %v216 = vpop.f32.mrb[0].mxu0
    %217 = vdwg.mxu0
    %v218 = vld [vmem:[%s1] sm:$0xff]
    %v219 = vld [vmem:[%s1 + $0x8] sm:$0xff]
    %222 = vrot.lane.b32.xlu0 %v210, 96
    %v223 = vpop.permute.xlu0 %222
    %224 = vrot.lane.b32.xlu0 %v215, 96
    %v225 = vpop.permute.xlu0 %224
    %vm226 = vcmask 64512
    %v227 = vsel %vm226, %v210, 0
    %v229 = vsel %vm226, %v215, 0
    %v231 = vsel %vm226, %v223, 0
    %v233 = vsel %vm226, %v225, 0
    %235 = vmatprep.subr.mxu0 0.0
    %236 = vmatpush1.xpose.msra.mxu0 %v231
    %237 = vmatprep.subr.mxu0 0.0
    %238 = vmatpush1.xpose.msra.mxu0 %v233
    %239 = vmatprep.subr.mxu0 0.0
    %240 = vmatpush1.xpose.msra.mxu0 0.0
    %241 = vmatprep.subr.mxu0 0.0
    %242 = vmatpush1.xpose.msra.mxu0 0.0
    %243 = vmatprep.subr.mxu0 0.0
    %244 = vmatpush1.xpose.msra.mxu0 0.0
    %245 = vmatprep.subr.mxu0 0.0
    %246 = vmatpush1.xpose.msra.mxu0 0.0
    %247 = vmatprep.subr.mxu0 0.0
    %248 = vmatpush1.xpose.msra.mxu0 0.0
    %249 = vmatprep.subr.mxu0 0.0
    %250 = vmatpush1.xpose.msra.mxu0 0.0
    %251 = vmatprep.subr.mxu0 0.0
    %252 = vmatpush1.xpose.msra.mxu0 0.0
    %253 = vmatprep.subr.mxu0 0.0
    %254 = vmatpush1.xpose.msra.mxu0 0.0
    %255 = vmatprep.subr.mxu0 0.0
    %256 = vmatpush1.xpose.msra.mxu0 0.0
    %257 = vmatprep.subr.mxu0 0.0
    %258 = vmatpush1.xpose.msra.mxu0 0.0
    %259 = vmatprep.subr.mxu0 0.0
    %260 = vmatpush1.xpose.msra.mxu0 0.0
    %261 = vmatprep.subr.mxu0 0.0
    %262 = vmatpush1.xpose.msra.mxu0 0.0
    %263 = vmatprep.subr.mxu0 0.0
    %264 = vmatpush1.xpose.msra.mxu0 0.0
    %265 = vmatprep.subr.mxu0 0.0
    %266 = vmatpush1.xpose.msra.mxu0 0.0
    %267 = vmatprep.subr.mxu0 0.0
    %268 = vmatpush1.xpose.msra.mxu0 0.0
    %269 = vmatprep.subr.mxu0 0.0
    %270 = vmatpush1.xpose.msra.mxu0 0.0
    %271 = vmatprep.subr.mxu0 0.0
    %272 = vmatpush1.xpose.msra.mxu0 0.0
    %273 = vmatprep.subr.mxu0 0.0
    %274 = vmatpush1.xpose.msra.mxu0 0.0
    %275 = vmatprep.subr.mxu0 0.0
    %276 = vmatpush1.xpose.msra.mxu0 0.0
    %277 = vmatprep.subr.mxu0 0.0
    %278 = vmatpush1.xpose.msra.mxu0 0.0
    %279 = vmatprep.subr.mxu0 0.0
    %280 = vmatpush1.xpose.msra.mxu0 0.0
    %281 = vmatprep.subr.mxu0 0.0
    %282 = vmatpush1.xpose.msra.mxu0 0.0
    %283 = vmatprep.subr.mxu0 0.0
    %284 = vmatpush1.xpose.msra.mxu0 0.0
    %285 = vmatprep.subr.mxu0 0.0
    %286 = vmatpush1.xpose.msra.mxu0 0.0
    %287 = vmatprep.subr.mxu0 0.0
    %288 = vmatpush1.xpose.msra.mxu0 0.0
    %289 = vmatprep.subr.mxu0 0.0
    %290 = vmatpush1.xpose.msra.mxu0 0.0
    %291 = vmatprep.subr.mxu0 0.0
    %292 = vmatpush1.xpose.msra.mxu0 0.0
    %293 = vmatprep.subr.mxu0 0.0
    %294 = vmatpush1.xpose.msra.mxu0 0.0
    %295 = vmatprep.subr.mxu0 0.0
    %296 = vmatpush1.xpose.msra.mxu0 0.0
    %297 = vmatprep.subr.mxu0 0.0
    %298 = vmatpush1.xpose.msra.mxu0 0.0
    %299 = vmatprep.mubr.f32.mxu0 0.0
    %300 = vmatmul.mubr.f32.gmra.mrb[0].mxu0 %v227
    %v301 = vpop.f32.mrb[0].mxu0
    %v302 = vadd.f32 %v218, %v301
    %v303 = vpop.f32.mrb[0].mxu0
    %304 = vmatprep.mubr.f32.mxu0 0.0
    %305 = vmatmul.mubr.f32.gmra.mrb[0].mxu0 %v229
    %v306 = vpop.f32.mrb[0].mxu0
    %v307 = vadd.f32 %v219, %v306
    %v308 = vpop.f32.mrb[0].mxu0
    %309 = vdwg.mxu0
    %vm310 = vcmask 130048
    %v311 = vsel %vm310, %v302, -inf
    %312 = vmax.xlane.f32.xlu0 %v311
    %v313 = vpop.xlane.xlu0 %312
    %v314 = vsel %vm310, %v307, -inf
    %315 = vmax.xlane.f32.xlu0 %v314
    %v316 = vpop.xlane.xlu0 %315
    %v317 = vsub.f32 %v302, %v313
    %v318 = vsub.f32 %v307, %v316
    %v319 = vmul.f32 %v317, 1.442695
    %v320 = vpow.pop %v319
    %v321 = vmul.f32 %v318, 1.442695
    %v322 = vpow.pop %v321
    %v323 = vsel %vm310, %v320, 0.0
    %324 = vadd.xlane.f32.xlu0 %v323
    %v325 = vpop.xlane.xlu0 %324
    %v326 = vsel %vm310, %v322, 0.0
    %327 = vadd.xlane.f32.xlu0 %v326
    %v328 = vpop.xlane.xlu0 %327
    %v329 = vrcp.pop %v325
    %v330 = vmul.f32 %v320, %v329
    %v331 = vrcp.pop %v328
    %v332 = vmul.f32 %v322, %v331
    %333 = vrot.lane.b32.xlu0 %v210, 64
    %v334 = vpop.permute.xlu0 %333
    %335 = vrot.lane.b32.xlu0 %v215, 64
    %v336 = vpop.permute.xlu0 %335
    %v340 = vsel %vm310, %v330, 0
    %v343 = vsel %vm310, %v332, 0
    %345 = vmatprep.subr.mxu0 0.0
    %346 = vmatpush1.msra.mxu0 %v334
    %347 = vmatprep.subr.mxu0 0.0
    %348 = vmatpush1.msra.mxu0 %v336
    %349 = vmatprep.subr.mxu0 0.0
    %350 = vmatpush1.msra.mxu0 0.0
    %351 = vmatprep.subr.mxu0 0.0
    %352 = vmatpush1.msra.mxu0 0.0
    %353 = vmatprep.subr.mxu0 0.0
    %354 = vmatpush1.msra.mxu0 0.0
    %355 = vmatprep.subr.mxu0 0.0
    %356 = vmatpush1.msra.mxu0 0.0
    %357 = vmatprep.subr.mxu0 0.0
    %358 = vmatpush1.msra.mxu0 0.0
    %359 = vmatprep.subr.mxu0 0.0
    %360 = vmatpush1.msra.mxu0 0.0
    %361 = vmatprep.subr.mxu0 0.0
    %362 = vmatpush1.msra.mxu0 0.0
    %363 = vmatprep.subr.mxu0 0.0
    %364 = vmatpush1.msra.mxu0 0.0
    %365 = vmatprep.subr.mxu0 0.0
    %366 = vmatpush1.msra.mxu0 0.0
    %367 = vmatprep.subr.mxu0 0.0
    %368 = vmatpush1.msra.mxu0 0.0
    %369 = vmatprep.subr.mxu0 0.0
    %370 = vmatpush1.msra.mxu0 0.0
    %371 = vmatprep.subr.mxu0 0.0
    %372 = vmatpush1.msra.mxu0 0.0
    %373 = vmatprep.subr.mxu0 0.0
    %374 = vmatpush1.msra.mxu0 0.0
    %375 = vmatprep.subr.mxu0 0.0
    %376 = vmatpush1.msra.mxu0 0.0
    %377 = vmatprep.subr.mxu0 0.0
    %378 = vmatpush1.msra.mxu0 0.0
    %379 = vmatprep.subr.mxu0 0.0
    %380 = vmatpush1.msra.mxu0 0.0
    %381 = vmatprep.subr.mxu0 0.0
    %382 = vmatpush1.msra.mxu0 0.0
    %383 = vmatprep.subr.mxu0 0.0
    %384 = vmatpush1.msra.mxu0 0.0
    %385 = vmatprep.subr.mxu0 0.0
    %386 = vmatpush1.msra.mxu0 0.0
    %387 = vmatprep.subr.mxu0 0.0
    %388 = vmatpush1.msra.mxu0 0.0
    %389 = vmatprep.subr.mxu0 0.0
    %390 = vmatpush1.msra.mxu0 0.0
    %391 = vmatprep.subr.mxu0 0.0
    %392 = vmatpush1.msra.mxu0 0.0
    %393 = vmatprep.subr.mxu0 0.0
    %394 = vmatpush1.msra.mxu0 0.0
    %395 = vmatprep.subr.mxu0 0.0
    %396 = vmatpush1.msra.mxu0 0.0
    %397 = vmatprep.subr.mxu0 0.0
    %398 = vmatpush1.msra.mxu0 0.0
    %399 = vmatprep.subr.mxu0 0.0
    %400 = vmatpush1.msra.mxu0 0.0
    %401 = vmatprep.subr.mxu0 0.0
    %402 = vmatpush1.msra.mxu0 0.0
    %403 = vmatprep.subr.mxu0 0.0
    %404 = vmatpush1.msra.mxu0 0.0
    %405 = vmatprep.subr.mxu0 0.0
    %406 = vmatpush1.msra.mxu0 0.0
    %407 = vmatprep.subr.mxu0 0.0
    %408 = vmatpush1.msra.mxu0 0.0
    %409 = vmatprep.mubr.f32.mxu0 0.0
    %410 = vmatmul.mubr.f32.gmra.mrb[0].mxu0 %v340
    %v411 = vpop.f32.mrb[0].mxu0
    %v412 = vadd.f32 0.0, %v411
    %v413 = vpop.f32.mrb[0].mxu0
    %414 = vmatprep.mubr.f32.mxu0 0.0
    %415 = vmatmul.mubr.f32.gmra.mrb[0].mxu0 %v343
    %v416 = vpop.f32.mrb[0].mxu0
    %v417 = vadd.f32 0.0, %v416
    %v418 = vpop.f32.mrb[0].mxu0
    %419 = vdwg.mxu0
    %v420 = vld [vmem:[%s3] sm:$0xff]
    %421 = vrot.lane.b32.xlu0 %v210, 120
    %v422 = vpop.permute.xlu0 %421
    %423 = vrot.lane.b32.xlu0 %v215, 120
    %v424 = vpop.permute.xlu0 %423
    %425 = vrot.lane.b32.xlu0 %v210, 88
    %v426 = vpop.permute.xlu0 %425
    %427 = vrot.lane.b32.xlu0 %v215, 88
    %v428 = vpop.permute.xlu0 %427
    %v429 = vsel %vm226, %v422, 0
    %v431 = vsel %vm226, %v424, 0
    %v433 = vsel %vm226, %v426, 0
    %v435 = vsel %vm226, %v428, 0
    %437 = vmatprep.subr.mxu0 0.0
    %438 = vmatpush1.xpose.msra.mxu0 %v433
    %439 = vmatprep.subr.mxu0 0.0
    %440 = vmatpush1.xpose.msra.mxu0 %v435
    %441 = vmatprep.subr.mxu0 0.0
    %442 = vmatpush1.xpose.msra.mxu0 0.0
    %443 = vmatprep.subr.mxu0 0.0
    %444 = vmatpush1.xpose.msra.mxu0 0.0
    %445 = vmatprep.subr.mxu0 0.0
    %446 = vmatpush1.xpose.msra.mxu0 0.0
    %447 = vmatprep.subr.mxu0 0.0
    %448 = vmatpush1.xpose.msra.mxu0 0.0
    %449 = vmatprep.subr.mxu0 0.0
    %450 = vmatpush1.xpose.msra.mxu0 0.0
    %451 = vmatprep.subr.mxu0 0.0
    %452 = vmatpush1.xpose.msra.mxu0 0.0
    %453 = vmatprep.subr.mxu0 0.0
    %454 = vmatpush1.xpose.msra.mxu0 0.0
    %455 = vmatprep.subr.mxu0 0.0
    %456 = vmatpush1.xpose.msra.mxu0 0.0
    %457 = vmatprep.subr.mxu0 0.0
    %458 = vmatpush1.xpose.msra.mxu0 0.0
    %459 = vmatprep.subr.mxu0 0.0
    %460 = vmatpush1.xpose.msra.mxu0 0.0
    %461 = vmatprep.subr.mxu0 0.0
    %462 = vmatpush1.xpose.msra.mxu0 0.0
    %463 = vmatprep.subr.mxu0 0.0
    %464 = vmatpush1.xpose.msra.mxu0 0.0
    %465 = vmatprep.subr.mxu0 0.0
    %466 = vmatpush1.xpose.msra.mxu0 0.0
    %467 = vmatprep.subr.mxu0 0.0
    %468 = vmatpush1.xpose.msra.mxu0 0.0
    %469 = vmatprep.subr.mxu0 0.0
    %470 = vmatpush1.xpose.msra.mxu0 0.0
    %471 = vmatprep.subr.mxu0 0.0
    %472 = vmatpush1.xpose.msra.mxu0 0.0
    %473 = vmatprep.subr.mxu0 0.0
    %474 = vmatpush1.xpose.msra.mxu0 0.0
    %475 = vmatprep.subr.mxu0 0.0
    %476 = vmatpush1.xpose.msra.mxu0 0.0
    %477 = vmatprep.subr.mxu0 0.0
    %478 = vmatpush1.xpose.msra.mxu0 0.0
    %479 = vmatprep.subr.mxu0 0.0
    %480 = vmatpush1.xpose.msra.mxu0 0.0
    %481 = vmatprep.subr.mxu0 0.0
    %482 = vmatpush1.xpose.msra.mxu0 0.0
    %483 = vmatprep.subr.mxu0 0.0
    %484 = vmatpush1.xpose.msra.mxu0 0.0
    %485 = vmatprep.subr.mxu0 0.0
    %486 = vmatpush1.xpose.msra.mxu0 0.0
    %487 = vmatprep.subr.mxu0 0.0
    %488 = vmatpush1.xpose.msra.mxu0 0.0
    %489 = vmatprep.subr.mxu0 0.0
    %490 = vmatpush1.xpose.msra.mxu0 0.0
    %491 = vmatprep.subr.mxu0 0.0
    %492 = vmatpush1.xpose.msra.mxu0 0.0
    %493 = vmatprep.subr.mxu0 0.0
    %494 = vmatpush1.xpose.msra.mxu0 0.0
    %495 = vmatprep.subr.mxu0 0.0
    %496 = vmatpush1.xpose.msra.mxu0 0.0
    %497 = vmatprep.subr.mxu0 0.0
    %498 = vmatpush1.xpose.msra.mxu0 0.0
    %499 = vmatprep.subr.mxu0 0.0
    %500 = vmatpush1.xpose.msra.mxu0 0.0
    %501 = vmatprep.mubr.f32.mxu0 0.0
    %502 = vmatmul.mubr.f32.gmra.mrb[0].mxu0 %v429
    %v503 = vpop.f32.mrb[0].mxu0
    %v504 = vadd.f32 %v218, %v503
    %v505 = vpop.f32.mrb[0].mxu0
    %506 = vmatprep.mubr.f32.mxu0 0.0
    %507 = vmatmul.mubr.f32.gmra.mrb[0].mxu0 %v431
    %v508 = vpop.f32.mrb[0].mxu0
    %v509 = vadd.f32 %v219, %v508
    %v510 = vpop.f32.mrb[0].mxu0
    %511 = vdwg.mxu0
    %v512 = vsel %vm310, %v504, -inf
    %513 = vmax.xlane.f32.xlu0 %v512
    %v514 = vpop.xlane.xlu0 %513
    %v515 = vsel %vm310, %v509, -inf
    %516 = vmax.xlane.f32.xlu0 %v515
    %v517 = vpop.xlane.xlu0 %516
    %v518 = vsub.f32 %v504, %v514
    %v519 = vsub.f32 %v509, %v517
    %v520 = vmul.f32 %v518, 1.442695
    %v521 = vpow.pop %v520
    %v522 = vmul.f32 %v519, 1.442695
    %v523 = vpow.pop %v522
    %v524 = vsel %vm310, %v521, 0.0
    %525 = vadd.xlane.f32.xlu0 %v524
    %v526 = vpop.xlane.xlu0 %525
    %v527 = vsel %vm310, %v523, 0.0
    %528 = vadd.xlane.f32.xlu0 %v527
    %v529 = vpop.xlane.xlu0 %528
    %v530 = vrcp.pop %v526
    %v531 = vmul.f32 %v521, %v530
    %v532 = vrcp.pop %v529
    %v533 = vmul.f32 %v523, %v532
    %534 = vrot.lane.b32.xlu0 %v210, 56
    %v535 = vpop.permute.xlu0 %534
    %536 = vrot.lane.b32.xlu0 %v215, 56
    %v537 = vpop.permute.xlu0 %536
    %v541 = vsel %vm310, %v531, 0
    %v544 = vsel %vm310, %v533, 0
    %546 = vmatprep.subr.mxu0 0.0
    %547 = vmatpush1.msra.mxu0 %v535
    %548 = vmatprep.subr.mxu0 0.0
    %549 = vmatpush1.msra.mxu0 %v537
    %550 = vmatprep.subr.mxu0 0.0
    %551 = vmatpush1.msra.mxu0 0.0
    %552 = vmatprep.subr.mxu0 0.0
    %553 = vmatpush1.msra.mxu0 0.0
    %554 = vmatprep.subr.mxu0 0.0
    %555 = vmatpush1.msra.mxu0 0.0
    %556 = vmatprep.subr.mxu0 0.0
    %557 = vmatpush1.msra.mxu0 0.0
    %558 = vmatprep.subr.mxu0 0.0
    %559 = vmatpush1.msra.mxu0 0.0
    %560 = vmatprep.subr.mxu0 0.0
    %561 = vmatpush1.msra.mxu0 0.0
    %562 = vmatprep.subr.mxu0 0.0
    %563 = vmatpush1.msra.mxu0 0.0
    %564 = vmatprep.subr.mxu0 0.0
    %565 = vmatpush1.msra.mxu0 0.0
    %566 = vmatprep.subr.mxu0 0.0
    %567 = vmatpush1.msra.mxu0 0.0
    %568 = vmatprep.subr.mxu0 0.0
    %569 = vmatpush1.msra.mxu0 0.0
    %570 = vmatprep.subr.mxu0 0.0
    %571 = vmatpush1.msra.mxu0 0.0
    %572 = vmatprep.subr.mxu0 0.0
    %573 = vmatpush1.msra.mxu0 0.0
    %574 = vmatprep.subr.mxu0 0.0
    %575 = vmatpush1.msra.mxu0 0.0
    %576 = vmatprep.subr.mxu0 0.0
    %577 = vmatpush1.msra.mxu0 0.0
    %578 = vmatprep.subr.mxu0 0.0
    %579 = vmatpush1.msra.mxu0 0.0
    %580 = vmatprep.subr.mxu0 0.0
    %581 = vmatpush1.msra.mxu0 0.0
    %582 = vmatprep.subr.mxu0 0.0
    %583 = vmatpush1.msra.mxu0 0.0
    %584 = vmatprep.subr.mxu0 0.0
    %585 = vmatpush1.msra.mxu0 0.0
    %586 = vmatprep.subr.mxu0 0.0
    %587 = vmatpush1.msra.mxu0 0.0
    %588 = vmatprep.subr.mxu0 0.0
    %589 = vmatpush1.msra.mxu0 0.0
    %590 = vmatprep.subr.mxu0 0.0
    %591 = vmatpush1.msra.mxu0 0.0
    %592 = vmatprep.subr.mxu0 0.0
    %593 = vmatpush1.msra.mxu0 0.0
    %594 = vmatprep.subr.mxu0 0.0
    %595 = vmatpush1.msra.mxu0 0.0
    %596 = vmatprep.subr.mxu0 0.0
    %597 = vmatpush1.msra.mxu0 0.0
    %598 = vmatprep.subr.mxu0 0.0
    %599 = vmatpush1.msra.mxu0 0.0
    %600 = vmatprep.subr.mxu0 0.0
    %601 = vmatpush1.msra.mxu0 0.0
    %602 = vmatprep.subr.mxu0 0.0
    %603 = vmatpush1.msra.mxu0 0.0
    %604 = vmatprep.subr.mxu0 0.0
    %605 = vmatpush1.msra.mxu0 0.0
    %606 = vmatprep.subr.mxu0 0.0
    %607 = vmatpush1.msra.mxu0 0.0
    %608 = vmatprep.subr.mxu0 0.0
    %609 = vmatpush1.msra.mxu0 0.0
    %610 = vmatprep.mubr.f32.mxu0 0.0
    %611 = vmatmul.mubr.f32.gmra.mrb[0].mxu0 %v541
    %v612 = vpop.f32.mrb[0].mxu0
    %v613 = vadd.f32 0.0, %v612
    %v614 = vpop.f32.mrb[0].mxu0
    %615 = vmatprep.mubr.f32.mxu0 0.0
    %616 = vmatmul.mubr.f32.gmra.mrb[0].mxu0 %v544
    %v617 = vpop.f32.mrb[0].mxu0
    %v618 = vadd.f32 0.0, %v617
    %v619 = vpop.f32.mrb[0].mxu0
    %620 = vdwg.mxu0
    %v621 = vld [vmem:[%s3 + $0x10] sm:$0xff]
    %623 = vrot.lane.b32.xlu0 %v621, 32
    %v624 = vpop.permute.xlu0 %623
    %v627 = vsel %vm226, %v613, 0
    %v630 = vsel %vm226, %v618, 0
    %632 = vmatprep.subr.mxu0 0.0
    %633 = vmatpush1.msra.mxu0 %v624
    %634 = vmatprep.subr.mxu0 0.0
    %635 = vmatpush1.msra.mxu0 0.0
    %636 = vmatprep.subr.mxu0 0.0
    %637 = vmatpush1.msra.mxu0 0.0
    %638 = vmatprep.subr.mxu0 0.0
    %639 = vmatpush1.msra.mxu0 0.0
    %640 = vmatprep.subr.mxu0 0.0
    %641 = vmatpush1.msra.mxu0 0.0
    %642 = vmatprep.subr.mxu0 0.0
    %643 = vmatpush1.msra.mxu0 0.0
    %644 = vmatprep.subr.mxu0 0.0
    %645 = vmatpush1.msra.mxu0 0.0
    %646 = vmatprep.subr.mxu0 0.0
    %647 = vmatpush1.msra.mxu0 0.0
    %648 = vmatprep.subr.mxu0 0.0
    %649 = vmatpush1.msra.mxu0 0.0
    %650 = vmatprep.subr.mxu0 0.0
    %651 = vmatpush1.msra.mxu0 0.0
    %652 = vmatprep.subr.mxu0 0.0
    %653 = vmatpush1.msra.mxu0 0.0
    %654 = vmatprep.subr.mxu0 0.0
    %655 = vmatpush1.msra.mxu0 0.0
    %656 = vmatprep.subr.mxu0 0.0
    %657 = vmatpush1.msra.mxu0 0.0
    %658 = vmatprep.subr.mxu0 0.0
    %659 = vmatpush1.msra.mxu0 0.0
    %660 = vmatprep.subr.mxu0 0.0
    %661 = vmatpush1.msra.mxu0 0.0
    %662 = vmatprep.subr.mxu0 0.0
    %663 = vmatpush1.msra.mxu0 0.0
    %664 = vmatprep.subr.mxu0 0.0
    %665 = vmatpush1.msra.mxu0 0.0
    %666 = vmatprep.subr.mxu0 0.0
    %667 = vmatpush1.msra.mxu0 0.0
    %668 = vmatprep.subr.mxu0 0.0
    %669 = vmatpush1.msra.mxu0 0.0
    %670 = vmatprep.subr.mxu0 0.0
    %671 = vmatpush1.msra.mxu0 0.0
    %672 = vmatprep.subr.mxu0 0.0
    %673 = vmatpush1.msra.mxu0 0.0
    %674 = vmatprep.subr.mxu0 0.0
    %675 = vmatpush1.msra.mxu0 0.0
    %676 = vmatprep.subr.mxu0 0.0
    %677 = vmatpush1.msra.mxu0 0.0
    %678 = vmatprep.subr.mxu0 0.0
    %679 = vmatpush1.msra.mxu0 0.0
    %680 = vmatprep.subr.mxu0 0.0
    %681 = vmatpush1.msra.mxu0 0.0
    %682 = vmatprep.subr.mxu0 0.0
    %683 = vmatpush1.msra.mxu0 0.0
    %684 = vmatprep.subr.mxu0 0.0
    %685 = vmatpush1.msra.mxu0 0.0
    %686 = vmatprep.subr.mxu0 0.0
    %687 = vmatpush1.msra.mxu0 0.0
    %688 = vmatprep.subr.mxu0 0.0
    %689 = vmatpush1.msra.mxu0 0.0
    %690 = vmatprep.subr.mxu0 0.0
    %691 = vmatpush1.msra.mxu0 0.0
    %692 = vmatprep.subr.mxu0 0.0
    %693 = vmatpush1.msra.mxu0 0.0
    %694 = vmatprep.subr.mxu0 0.0
    %695 = vmatpush1.msra.mxu0 0.0
    %696 = vmatprep.mubr.f32.mxu0 0.0
    %697 = vmatmul.mubr.f32.gmra.mrb[0].mxu0 %v627
    %v698 = vpop.f32.mrb[0].mxu0
    %v699 = vadd.f32 0.0, %v698
    %v700 = vpop.f32.mrb[0].mxu0
    %701 = vmatprep.mubr.f32.mxu0 0.0
    %702 = vmatmul.mubr.f32.gmra.mrb[0].mxu0 %v630
    %v703 = vpop.f32.mrb[0].mxu0
    %v704 = vadd.f32 0.0, %v703
    %v705 = vpop.f32.mrb[0].mxu0
    %706 = vdwg.mxu0
    %708 = vrot.lane.b32.xlu0 %v420, 32
    %v709 = vpop.permute.xlu0 %708
    %v712 = vsel %vm226, %v412, 0
    %v715 = vsel %vm226, %v417, 0
    %717 = vmatprep.subr.mxu0 0.0
    %718 = vmatpush1.msra.mxu0 %v709
    %719 = vmatprep.subr.mxu0 0.0
    %720 = vmatpush1.msra.mxu0 0.0
    %721 = vmatprep.subr.mxu0 0.0
    %722 = vmatpush1.msra.mxu0 0.0
    %723 = vmatprep.subr.mxu0 0.0
    %724 = vmatpush1.msra.mxu0 0.0
    %725 = vmatprep.subr.mxu0 0.0
    %726 = vmatpush1.msra.mxu0 0.0
    %727 = vmatprep.subr.mxu0 0.0
    %728 = vmatpush1.msra.mxu0 0.0
    %729 = vmatprep.subr.mxu0 0.0
    %730 = vmatpush1.msra.mxu0 0.0
    %731 = vmatprep.subr.mxu0 0.0
    %732 = vmatpush1.msra.mxu0 0.0
    %733 = vmatprep.subr.mxu0 0.0
    %734 = vmatpush1.msra.mxu0 0.0
    %735 = vmatprep.subr.mxu0 0.0
    %736 = vmatpush1.msra.mxu0 0.0
    %737 = vmatprep.subr.mxu0 0.0
    %738 = vmatpush1.msra.mxu0 0.0
    %739 = vmatprep.subr.mxu0 0.0
    %740 = vmatpush1.msra.mxu0 0.0
    %741 = vmatprep.subr.mxu0 0.0
    %742 = vmatpush1.msra.mxu0 0.0
    %743 = vmatprep.subr.mxu0 0.0
    %744 = vmatpush1.msra.mxu0 0.0
    %745 = vmatprep.subr.mxu0 0.0
    %746 = vmatpush1.msra.mxu0 0.0
    %747 = vmatprep.subr.mxu0 0.0
    %748 = vmatpush1.msra.mxu0 0.0
    %749 = vmatprep.subr.mxu0 0.0
    %750 = vmatpush1.msra.mxu0 0.0
    %751 = vmatprep.subr.mxu0 0.0
    %752 = vmatpush1.msra.mxu0 0.0
    %753 = vmatprep.subr.mxu0 0.0
    %754 = vmatpush1.msra.mxu0 0.0
    %755 = vmatprep.subr.mxu0 0.0
    %756 = vmatpush1.msra.mxu0 0.0
    %757 = vmatprep.subr.mxu0 0.0
    %758 = vmatpush1.msra.mxu0 0.0
    %759 = vmatprep.subr.mxu0 0.0
    %760 = vmatpush1.msra.mxu0 0.0
    %761 = vmatprep.subr.mxu0 0.0
    %762 = vmatpush1.msra.mxu0 0.0
    %763 = vmatprep.subr.mxu0 0.0
    %764 = vmatpush1.msra.mxu0 0.0
    %765 = vmatprep.subr.mxu0 0.0
    %766 = vmatpush1.msra.mxu0 0.0
    %767 = vmatprep.subr.mxu0 0.0
    %768 = vmatpush1.msra.mxu0 0.0
    %769 = vmatprep.subr.mxu0 0.0
    %770 = vmatpush1.msra.mxu0 0.0
    %771 = vmatprep.subr.mxu0 0.0
    %772 = vmatpush1.msra.mxu0 0.0
    %773 = vmatprep.subr.mxu0 0.0
    %774 = vmatpush1.msra.mxu0 0.0
    %775 = vmatprep.subr.mxu0 0.0
    %776 = vmatpush1.msra.mxu0 0.0
    %777 = vmatprep.subr.mxu0 0.0
    %778 = vmatpush1.msra.mxu0 0.0
    %779 = vmatprep.subr.mxu0 0.0
    %780 = vmatpush1.msra.mxu0 0.0
    %781 = vmatprep.mubr.f32.mxu0 0.0
    %782 = vmatmul.mubr.f32.gmra.mrb[0].mxu0 %v712
    %v783 = vpop.f32.mrb[0].mxu0
    %v784 = vadd.f32 %v699, %v783
    %v785 = vpop.f32.mrb[0].mxu0
    %786 = vmatprep.mubr.f32.mxu0 0.0
    %787 = vmatmul.mubr.f32.gmra.mrb[0].mxu0 %v715
    %v788 = vpop.f32.mrb[0].mxu0
    %v789 = vadd.f32 %v704, %v788
    %v790 = vpop.f32.mrb[0].mxu0
    %791 = vdwg.mxu0
    %792 = vrot.lane.b32.xlu0 %v210, 112
    %v793 = vpop.permute.xlu0 %792
    %794 = vrot.lane.b32.xlu0 %v215, 112
    %v795 = vpop.permute.xlu0 %794
    %796 = vrot.lane.b32.xlu0 %v210, 80
    %v797 = vpop.permute.xlu0 %796
    %798 = vrot.lane.b32.xlu0 %v215, 80
    %v799 = vpop.permute.xlu0 %798
    %v800 = vsel %vm226, %v793, 0
    %v802 = vsel %vm226, %v795, 0
    %v804 = vsel %vm226, %v797, 0
    %v806 = vsel %vm226, %v799, 0
    %808 = vmatprep.subr.mxu0 0.0
    %809 = vmatpush1.xpose.msra.mxu0 %v804
    %810 = vmatprep.subr.mxu0 0.0
    %811 = vmatpush1.xpose.msra.mxu0 %v806
    %812 = vmatprep.subr.mxu0 0.0
    %813 = vmatpush1.xpose.msra.mxu0 0.0
    %814 = vmatprep.subr.mxu0 0.0
    %815 = vmatpush1.xpose.msra.mxu0 0.0
    %816 = vmatprep.subr.mxu0 0.0
    %817 = vmatpush1.xpose.msra.mxu0 0.0
    %818 = vmatprep.subr.mxu0 0.0
    %819 = vmatpush1.xpose.msra.mxu0 0.0
    %820 = vmatprep.subr.mxu0 0.0
    %821 = vmatpush1.xpose.msra.mxu0 0.0
    %822 = vmatprep.subr.mxu0 0.0
    %823 = vmatpush1.xpose.msra.mxu0 0.0
    %824 = vmatprep.subr.mxu0 0.0
    %825 = vmatpush1.xpose.msra.mxu0 0.0
    %826 = vmatprep.subr.mxu0 0.0
    %827 = vmatpush1.xpose.msra.mxu0 0.0
    %828 = vmatprep.subr.mxu0 0.0
    %829 = vmatpush1.xpose.msra.mxu0 0.0
    %830 = vmatprep.subr.mxu0 0.0
    %831 = vmatpush1.xpose.msra.mxu0 0.0
    %832 = vmatprep.subr.mxu0 0.0
    %833 = vmatpush1.xpose.msra.mxu0 0.0
    %834 = vmatprep.subr.mxu0 0.0
    %835 = vmatpush1.xpose.msra.mxu0 0.0
    %836 = vmatprep.subr.mxu0 0.0
    %837 = vmatpush1.xpose.msra.mxu0 0.0
    %838 = vmatprep.subr.mxu0 0.0
    %839 = vmatpush1.xpose.msra.mxu0 0.0
    %840 = vmatprep.subr.mxu0 0.0
    %841 = vmatpush1.xpose.msra.mxu0 0.0
    %842 = vmatprep.subr.mxu0 0.0
    %843 = vmatpush1.xpose.msra.mxu0 0.0
    %844 = vmatprep.subr.mxu0 0.0
    %845 = vmatpush1.xpose.msra.mxu0 0.0
    %846 = vmatprep.subr.mxu0 0.0
    %847 = vmatpush1.xpose.msra.mxu0 0.0
    %848 = vmatprep.subr.mxu0 0.0
    %849 = vmatpush1.xpose.msra.mxu0 0.0
    %850 = vmatprep.subr.mxu0 0.0
    %851 = vmatpush1.xpose.msra.mxu0 0.0
    %852 = vmatprep.subr.mxu0 0.0
    %853 = vmatpush1.xpose.msra.mxu0 0.0
    %854 = vmatprep.subr.mxu0 0.0
    %855 = vmatpush1.xpose.msra.mxu0 0.0
    %856 = vmatprep.subr.mxu0 0.0
    %857 = vmatpush1.xpose.msra.mxu0 0.0
    %858 = vmatprep.subr.mxu0 0.0
    %859 = vmatpush1.xpose.msra.mxu0 0.0
    %860 = vmatprep.subr.mxu0 0.0
    %861 = vmatpush1.xpose.msra.mxu0 0.0
    %862 = vmatprep.subr.mxu0 0.0
    %863 = vmatpush1.xpose.msra.mxu0 0.0
    %864 = vmatprep.subr.mxu0 0.0
    %865 = vmatpush1.xpose.msra.mxu0 0.0
    %866 = vmatprep.subr.mxu0 0.0
    %867 = vmatpush1.xpose.msra.mxu0 0.0
    %868 = vmatprep.subr.mxu0 0.0
    %869 = vmatpush1.xpose.msra.mxu0 0.0
    %870 = vmatprep.subr.mxu0 0.0
    %871 = vmatpush1.xpose.msra.mxu0 0.0
    %872 = vmatprep.mubr.f32.mxu0 0.0
    %873 = vmatmul.mubr.f32.gmra.mrb[0].mxu0 %v800
    %v874 = vpop.f32.mrb[0].mxu0
    %v875 = vadd.f32 %v218, %v874
    %v876 = vpop.f32.mrb[0].mxu0
    %877 = vmatprep.mubr.f32.mxu0 0.0
    %878 = vmatmul.mubr.f32.gmra.mrb[0].mxu0 %v802
    %v879 = vpop.f32.mrb[0].mxu0
    %v880 = vadd.f32 %v219, %v879
    %v881 = vpop.f32.mrb[0].mxu0
    %882 = vdwg.mxu0
    %v883 = vsel %vm310, %v875, -inf
    %884 = vmax.xlane.f32.xlu0 %v883
    %v885 = vpop.xlane.xlu0 %884
    %v886 = vsel %vm310, %v880, -inf
    %887 = vmax.xlane.f32.xlu0 %v886
    %v888 = vpop.xlane.xlu0 %887
    %v889 = vsub.f32 %v875, %v885
    %v890 = vsub.f32 %v880, %v888
    %v891 = vmul.f32 %v889, 1.442695
    %v892 = vpow.pop %v891
    %v893 = vmul.f32 %v890, 1.442695
    %v894 = vpow.pop %v893
    %v895 = vsel %vm310, %v892, 0.0
    %896 = vadd.xlane.f32.xlu0 %v895
    %v897 = vpop.xlane.xlu0 %896
    %v898 = vsel %vm310, %v894, 0.0
    %899 = vadd.xlane.f32.xlu0 %v898
    %v900 = vpop.xlane.xlu0 %899
    %v901 = vrcp.pop %v897
    %v902 = vmul.f32 %v892, %v901
    %v903 = vrcp.pop %v900
    %v904 = vmul.f32 %v894, %v903
    %905 = vrot.lane.b32.xlu0 %v210, 48
    %v906 = vpop.permute.xlu0 %905
    %907 = vrot.lane.b32.xlu0 %v215, 48
    %v908 = vpop.permute.xlu0 %907
    %v912 = vsel %vm310, %v902, 0
    %v915 = vsel %vm310, %v904, 0
    %917 = vmatprep.subr.mxu0 0.0
    %918 = vmatpush1.msra.mxu0 %v906
    %919 = vmatprep.subr.mxu0 0.0
    %920 = vmatpush1.msra.mxu0 %v908
    %921 = vmatprep.subr.mxu0 0.0
    %922 = vmatpush1.msra.mxu0 0.0
    %923 = vmatprep.subr.mxu0 0.0
    %924 = vmatpush1.msra.mxu0 0.0
    %925 = vmatprep.subr.mxu0 0.0
    %926 = vmatpush1.msra.mxu0 0.0
    %927 = vmatprep.subr.mxu0 0.0
    %928 = vmatpush1.msra.mxu0 0.0
    %929 = vmatprep.subr.mxu0 0.0
    %930 = vmatpush1.msra.mxu0 0.0
    %931 = vmatprep.subr.mxu0 0.0
    %932 = vmatpush1.msra.mxu0 0.0
    %933 = vmatprep.subr.mxu0 0.0
    %934 = vmatpush1.msra.mxu0 0.0
    %935 = vmatprep.subr.mxu0 0.0
    %936 = vmatpush1.msra.mxu0 0.0
    %937 = vmatprep.subr.mxu0 0.0
    %938 = vmatpush1.msra.mxu0 0.0
    %939 = vmatprep.subr.mxu0 0.0
    %940 = vmatpush1.msra.mxu0 0.0
    %941 = vmatprep.subr.mxu0 0.0
    %942 = vmatpush1.msra.mxu0 0.0
    %943 = vmatprep.subr.mxu0 0.0
    %944 = vmatpush1.msra.mxu0 0.0
    %945 = vmatprep.subr.mxu0 0.0
    %946 = vmatpush1.msra.mxu0 0.0
    %947 = vmatprep.subr.mxu0 0.0
    %948 = vmatpush1.msra.mxu0 0.0
    %949 = vmatprep.subr.mxu0 0.0
    %950 = vmatpush1.msra.mxu0 0.0
    %951 = vmatprep.subr.mxu0 0.0
    %952 = vmatpush1.msra.mxu0 0.0
    %953 = vmatprep.subr.mxu0 0.0
    %954 = vmatpush1.msra.mxu0 0.0
    %955 = vmatprep.subr.mxu0 0.0
    %956 = vmatpush1.msra.mxu0 0.0
    %957 = vmatprep.subr.mxu0 0.0
    %958 = vmatpush1.msra.mxu0 0.0
    %959 = vmatprep.subr.mxu0 0.0
    %960 = vmatpush1.msra.mxu0 0.0
    %961 = vmatprep.subr.mxu0 0.0
    %962 = vmatpush1.msra.mxu0 0.0
    %963 = vmatprep.subr.mxu0 0.0
    %964 = vmatpush1.msra.mxu0 0.0
    %965 = vmatprep.subr.mxu0 0.0
    %966 = vmatpush1.msra.mxu0 0.0
    %967 = vmatprep.subr.mxu0 0.0
    %968 = vmatpush1.msra.mxu0 0.0
    %969 = vmatprep.subr.mxu0 0.0
    %970 = vmatpush1.msra.mxu0 0.0
    %971 = vmatprep.subr.mxu0 0.0
    %972 = vmatpush1.msra.mxu0 0.0
    %973 = vmatprep.subr.mxu0 0.0
    %974 = vmatpush1.msra.mxu0 0.0
    %975 = vmatprep.subr.mxu0 0.0
    %976 = vmatpush1.msra.mxu0 0.0
    %977 = vmatprep.subr.mxu0 0.0
    %978 = vmatpush1.msra.mxu0 0.0
    %979 = vmatprep.subr.mxu0 0.0
    %980 = vmatpush1.msra.mxu0 0.0
    %981 = vmatprep.mubr.f32.mxu0 0.0
    %982 = vmatmul.mubr.f32.gmra.mrb[0].mxu0 %v912
    %v983 = vpop.f32.mrb[0].mxu0
    %v984 = vadd.f32 0.0, %v983
    %v985 = vpop.f32.mrb[0].mxu0
    %986 = vmatprep.mubr.f32.mxu0 0.0
    %987 = vmatmul.mubr.f32.gmra.mrb[0].mxu0 %v915
    %v988 = vpop.f32.mrb[0].mxu0
    %v989 = vadd.f32 0.0, %v988
    %v990 = vpop.f32.mrb[0].mxu0
    %991 = vdwg.mxu0
    %v992 = vld [vmem:[%s3 + $0x20] sm:$0xff]
    %994 = vrot.lane.b32.xlu0 %v992, 32
    %v995 = vpop.permute.xlu0 %994
    %v998 = vsel %vm226, %v984, 0
    %v1001 = vsel %vm226, %v989, 0
    %1003 = vmatprep.subr.mxu0 0.0
    %1004 = vmatpush1.msra.mxu0 %v995
    %1005 = vmatprep.subr.mxu0 0.0
    %1006 = vmatpush1.msra.mxu0 0.0
    %1007 = vmatprep.subr.mxu0 0.0
    %1008 = vmatpush1.msra.mxu0 0.0
    %1009 = vmatprep.subr.mxu0 0.0
    %1010 = vmatpush1.msra.mxu0 0.0
    %1011 = vmatprep.subr.mxu0 0.0
    %1012 = vmatpush1.msra.mxu0 0.0
    %1013 = vmatprep.subr.mxu0 0.0
    %1014 = vmatpush1.msra.mxu0 0.0
    %1015 = vmatprep.subr.mxu0 0.0
    %1016 = vmatpush1.msra.mxu0 0.0
    %1017 = vmatprep.subr.mxu0 0.0
    %1018 = vmatpush1.msra.mxu0 0.0
    %1019 = vmatprep.subr.mxu0 0.0
    %1020 = vmatpush1.msra.mxu0 0.0
    %1021 = vmatprep.subr.mxu0 0.0
    %1022 = vmatpush1.msra.mxu0 0.0
    %1023 = vmatprep.subr.mxu0 0.0
    %1024 = vmatpush1.msra.mxu0 0.0
    %1025 = vmatprep.subr.mxu0 0.0
    %1026 = vmatpush1.msra.mxu0 0.0
    %1027 = vmatprep.subr.mxu0 0.0
    %1028 = vmatpush1.msra.mxu0 0.0
    %1029 = vmatprep.subr.mxu0 0.0
    %1030 = vmatpush1.msra.mxu0 0.0
    %1031 = vmatprep.subr.mxu0 0.0
    %1032 = vmatpush1.msra.mxu0 0.0
    %1033 = vmatprep.subr.mxu0 0.0
    %1034 = vmatpush1.msra.mxu0 0.0
    %1035 = vmatprep.subr.mxu0 0.0
    %1036 = vmatpush1.msra.mxu0 0.0
    %1037 = vmatprep.subr.mxu0 0.0
    %1038 = vmatpush1.msra.mxu0 0.0
    %1039 = vmatprep.subr.mxu0 0.0
    %1040 = vmatpush1.msra.mxu0 0.0
    %1041 = vmatprep.subr.mxu0 0.0
    %1042 = vmatpush1.msra.mxu0 0.0
    %1043 = vmatprep.subr.mxu0 0.0
    %1044 = vmatpush1.msra.mxu0 0.0
    %1045 = vmatprep.subr.mxu0 0.0
    %1046 = vmatpush1.msra.mxu0 0.0
    %1047 = vmatprep.subr.mxu0 0.0
    %1048 = vmatpush1.msra.mxu0 0.0
    %1049 = vmatprep.subr.mxu0 0.0
    %1050 = vmatpush1.msra.mxu0 0.0
    %1051 = vmatprep.subr.mxu0 0.0
    %1052 = vmatpush1.msra.mxu0 0.0
    %1053 = vmatprep.subr.mxu0 0.0
    %1054 = vmatpush1.msra.mxu0 0.0
    %1055 = vmatprep.subr.mxu0 0.0
    %1056 = vmatpush1.msra.mxu0 0.0
    %1057 = vmatprep.subr.mxu0 0.0
    %1058 = vmatpush1.msra.mxu0 0.0
    %1059 = vmatprep.subr.mxu0 0.0
    %1060 = vmatpush1.msra.mxu0 0.0
    %1061 = vmatprep.subr.mxu0 0.0
    %1062 = vmatpush1.msra.mxu0 0.0
    %1063 = vmatprep.subr.mxu0 0.0
    %1064 = vmatpush1.msra.mxu0 0.0
    %1065 = vmatprep.subr.mxu0 0.0
    %1066 = vmatpush1.msra.mxu0 0.0
    %1067 = vmatprep.mubr.f32.mxu0 0.0
    %1068 = vmatmul.mubr.f32.gmra.mrb[0].mxu0 %v998
    %v1069 = vpop.f32.mrb[0].mxu0
    %v1070 = vadd.f32 0.0, %v1069
    %v1071 = vpop.f32.mrb[0].mxu0
    %1072 = vmatprep.mubr.f32.mxu0 0.0
    %1073 = vmatmul.mubr.f32.gmra.mrb[0].mxu0 %v1001
    %v1074 = vpop.f32.mrb[0].mxu0
    %v1075 = vadd.f32 0.0, %v1074
    %v1076 = vpop.f32.mrb[0].mxu0
    %1077 = vdwg.mxu0
    %v1078 = vadd.f32 %v784, %v1070
    %v1079 = vadd.f32 %v789, %v1075
    %1080 = vrot.lane.b32.xlu0 %v210, 104
    %v1081 = vpop.permute.xlu0 %1080
    %1082 = vrot.lane.b32.xlu0 %v215, 104
    %v1083 = vpop.permute.xlu0 %1082
    %1084 = vrot.lane.b32.xlu0 %v210, 72
    %v1085 = vpop.permute.xlu0 %1084
    %1086 = vrot.lane.b32.xlu0 %v215, 72
    %v1087 = vpop.permute.xlu0 %1086
    %v1088 = vsel %vm226, %v1081, 0
    %v1090 = vsel %vm226, %v1083, 0
    %v1092 = vsel %vm226, %v1085, 0
    %v1094 = vsel %vm226, %v1087, 0
    %1096 = vmatprep.subr.mxu0 0.0
    %1097 = vmatpush1.xpose.msra.mxu0 %v1092
    %1098 = vmatprep.subr.mxu0 0.0
    %1099 = vmatpush1.xpose.msra.mxu0 %v1094
    %1100 = vmatprep.subr.mxu0 0.0
    %1101 = vmatpush1.xpose.msra.mxu0 0.0
    %1102 = vmatprep.subr.mxu0 0.0
    %1103 = vmatpush1.xpose.msra.mxu0 0.0
    %1104 = vmatprep.subr.mxu0 0.0
    %1105 = vmatpush1.xpose.msra.mxu0 0.0
    %1106 = vmatprep.subr.mxu0 0.0
    %1107 = vmatpush1.xpose.msra.mxu0 0.0
    %1108 = vmatprep.subr.mxu0 0.0
    %1109 = vmatpush1.xpose.msra.mxu0 0.0
    %1110 = vmatprep.subr.mxu0 0.0
    %1111 = vmatpush1.xpose.msra.mxu0 0.0
    %1112 = vmatprep.subr.mxu0 0.0
    %1113 = vmatpush1.xpose.msra.mxu0 0.0
    %1114 = vmatprep.subr.mxu0 0.0
    %1115 = vmatpush1.xpose.msra.mxu0 0.0
    %1116 = vmatprep.subr.mxu0 0.0
    %1117 = vmatpush1.xpose.msra.mxu0 0.0
    %1118 = vmatprep.subr.mxu0 0.0
    %1119 = vmatpush1.xpose.msra.mxu0 0.0
    %1120 = vmatprep.subr.mxu0 0.0
    %1121 = vmatpush1.xpose.msra.mxu0 0.0
    %1122 = vmatprep.subr.mxu0 0.0
    %1123 = vmatpush1.xpose.msra.mxu0 0.0
    %1124 = vmatprep.subr.mxu0 0.0
    %1125 = vmatpush1.xpose.msra.mxu0 0.0
    %1126 = vmatprep.subr.mxu0 0.0
    %1127 = vmatpush1.xpose.msra.mxu0 0.0
    %1128 = vmatprep.subr.mxu0 0.0
    %1129 = vmatpush1.xpose.msra.mxu0 0.0
    %1130 = vmatprep.subr.mxu0 0.0
    %1131 = vmatpush1.xpose.msra.mxu0 0.0
    %1132 = vmatprep.subr.mxu0 0.0
    %1133 = vmatpush1.xpose.msra.mxu0 0.0
    %1134 = vmatprep.subr.mxu0 0.0
    %1135 = vmatpush1.xpose.msra.mxu0 0.0
    %1136 = vmatprep.subr.mxu0 0.0
    %1137 = vmatpush1.xpose.msra.mxu0 0.0
    %1138 = vmatprep.subr.mxu0 0.0
    %1139 = vmatpush1.xpose.msra.mxu0 0.0
    %1140 = vmatprep.subr.mxu0 0.0
    %1141 = vmatpush1.xpose.msra.mxu0 0.0
    %1142 = vmatprep.subr.mxu0 0.0
    %1143 = vmatpush1.xpose.msra.mxu0 0.0
    %1144 = vmatprep.subr.mxu0 0.0
    %1145 = vmatpush1.xpose.msra.mxu0 0.0
    %1146 = vmatprep.subr.mxu0 0.0
    %1147 = vmatpush1.xpose.msra.mxu0 0.0
    %1148 = vmatprep.subr.mxu0 0.0
    %1149 = vmatpush1.xpose.msra.mxu0 0.0
    %1150 = vmatprep.subr.mxu0 0.0
    %1151 = vmatpush1.xpose.msra.mxu0 0.0
    %1152 = vmatprep.subr.mxu0 0.0
    %1153 = vmatpush1.xpose.msra.mxu0 0.0
    %1154 = vmatprep.subr.mxu0 0.0
    %1155 = vmatpush1.xpose.msra.mxu0 0.0
    %1156 = vmatprep.subr.mxu0 0.0
    %1157 = vmatpush1.xpose.msra.mxu0 0.0
    %1158 = vmatprep.subr.mxu0 0.0
    %1159 = vmatpush1.xpose.msra.mxu0 0.0
    %1160 = vmatprep.mubr.f32.mxu0 0.0
    %1161 = vmatmul.mubr.f32.gmra.mrb[0].mxu0 %v1088
    %v1162 = vpop.f32.mrb[0].mxu0
    %v1163 = vadd.f32 %v218, %v1162
    %v1164 = vpop.f32.mrb[0].mxu0
    %1165 = vmatprep.mubr.f32.mxu0 0.0
    %1166 = vmatmul.mubr.f32.gmra.mrb[0].mxu0 %v1090
    %v1167 = vpop.f32.mrb[0].mxu0
    %v1168 = vadd.f32 %v219, %v1167
    %v1169 = vpop.f32.mrb[0].mxu0
    %1170 = vdwg.mxu0
    %v1171 = vsel %vm310, %v1163, -inf
    %1172 = vmax.xlane.f32.xlu0 %v1171
    %v1173 = vpop.xlane.xlu0 %1172
    %v1174 = vsel %vm310, %v1168, -inf
    %1175 = vmax.xlane.f32.xlu0 %v1174
    %v1176 = vpop.xlane.xlu0 %1175
    %v1177 = vsub.f32 %v1163, %v1173
    %v1178 = vsub.f32 %v1168, %v1176
    %v1179 = vmul.f32 %v1177, 1.442695
    %v1180 = vpow.pop %v1179
    %v1181 = vmul.f32 %v1178, 1.442695
    %v1182 = vpow.pop %v1181
    %v1183 = vsel %vm310, %v1180, 0.0
    %1184 = vadd.xlane.f32.xlu0 %v1183
    %v1185 = vpop.xlane.xlu0 %1184
    %v1186 = vsel %vm310, %v1182, 0.0
    %1187 = vadd.xlane.f32.xlu0 %v1186
    %v1188 = vpop.xlane.xlu0 %1187
    %v1189 = vrcp.pop %v1185
    %v1190 = vmul.f32 %v1180, %v1189
    %v1191 = vrcp.pop %v1188
    %v1192 = vmul.f32 %v1182, %v1191
    %1193 = vrot.lane.b32.xlu0 %v210, 40
    %v1194 = vpop.permute.xlu0 %1193
    %1195 = vrot.lane.b32.xlu0 %v215, 40
    %v1196 = vpop.permute.xlu0 %1195
    %v1200 = vsel %vm310, %v1190, 0
    %v1203 = vsel %vm310, %v1192, 0
    %1205 = vmatprep.subr.mxu0 0.0
    %1206 = vmatpush1.msra.mxu0 %v1194
    %1207 = vmatprep.subr.mxu0 0.0
    %1208 = vmatpush1.msra.mxu0 %v1196
    %1209 = vmatprep.subr.mxu0 0.0
    %1210 = vmatpush1.msra.mxu0 0.0
    %1211 = vmatprep.subr.mxu0 0.0
    %1212 = vmatpush1.msra.mxu0 0.0
    %1213 = vmatprep.subr.mxu0 0.0
    %1214 = vmatpush1.msra.mxu0 0.0
    %1215 = vmatprep.subr.mxu0 0.0
    %1216 = vmatpush1.msra.mxu0 0.0
    %1217 = vmatprep.subr.mxu0 0.0
    %1218 = vmatpush1.msra.mxu0 0.0
    %1219 = vmatprep.subr.mxu0 0.0
    %1220 = vmatpush1.msra.mxu0 0.0
    %1221 = vmatprep.subr.mxu0 0.0
    %1222 = vmatpush1.msra.mxu0 0.0
    %1223 = vmatprep.subr.mxu0 0.0
    %1224 = vmatpush1.msra.mxu0 0.0
    %1225 = vmatprep.subr.mxu0 0.0
    %1226 = vmatpush1.msra.mxu0 0.0
    %1227 = vmatprep.subr.mxu0 0.0
    %1228 = vmatpush1.msra.mxu0 0.0
    %1229 = vmatprep.subr.mxu0 0.0
    %1230 = vmatpush1.msra.mxu0 0.0
    %1231 = vmatprep.subr.mxu0 0.0
    %1232 = vmatpush1.msra.mxu0 0.0
    %1233 = vmatprep.subr.mxu0 0.0
    %1234 = vmatpush1.msra.mxu0 0.0
    %1235 = vmatprep.subr.mxu0 0.0
    %1236 = vmatpush1.msra.mxu0 0.0
    %1237 = vmatprep.subr.mxu0 0.0
    %1238 = vmatpush1.msra.mxu0 0.0
    %1239 = vmatprep.subr.mxu0 0.0
    %1240 = vmatpush1.msra.mxu0 0.0
    %1241 = vmatprep.subr.mxu0 0.0
    %1242 = vmatpush1.msra.mxu0 0.0
    %1243 = vmatprep.subr.mxu0 0.0
    %1244 = vmatpush1.msra.mxu0 0.0
    %1245 = vmatprep.subr.mxu0 0.0
    %1246 = vmatpush1.msra.mxu0 0.0
    %1247 = vmatprep.subr.mxu0 0.0
    %1248 = vmatpush1.msra.mxu0 0.0
    %1249 = vmatprep.subr.mxu0 0.0
    %1250 = vmatpush1.msra.mxu0 0.0
    %1251 = vmatprep.subr.mxu0 0.0
    %1252 = vmatpush1.msra.mxu0 0.0
    %1253 = vmatprep.subr.mxu0 0.0
    %1254 = vmatpush1.msra.mxu0 0.0
    %1255 = vmatprep.subr.mxu0 0.0
    %1256 = vmatpush1.msra.mxu0 0.0
    %1257 = vmatprep.subr.mxu0 0.0
    %1258 = vmatpush1.msra.mxu0 0.0
    %1259 = vmatprep.subr.mxu0 0.0
    %1260 = vmatpush1.msra.mxu0 0.0
    %1261 = vmatprep.subr.mxu0 0.0
    %1262 = vmatpush1.msra.mxu0 0.0
    %1263 = vmatprep.subr.mxu0 0.0
    %1264 = vmatpush1.msra.mxu0 0.0
    %1265 = vmatprep.subr.mxu0 0.0
    %1266 = vmatpush1.msra.mxu0 0.0
    %1267 = vmatprep.subr.mxu0 0.0
    %1268 = vmatpush1.msra.mxu0 0.0
    %1269 = vmatprep.mubr.f32.mxu0 0.0
    %1270 = vmatmul.mubr.f32.gmra.mrb[0].mxu0 %v1200
    %v1271 = vpop.f32.mrb[0].mxu0
    %v1272 = vadd.f32 0.0, %v1271
    %v1273 = vpop.f32.mrb[0].mxu0
    %1274 = vmatprep.mubr.f32.mxu0 0.0
    %1275 = vmatmul.mubr.f32.gmra.mrb[0].mxu0 %v1203
    %v1276 = vpop.f32.mrb[0].mxu0
    %v1277 = vadd.f32 0.0, %v1276
    %v1278 = vpop.f32.mrb[0].mxu0
    %1279 = vdwg.mxu0
    %1281 = vrot.lane.b32.xlu0 %v130, 32
    %v1282 = vpop.permute.xlu0 %1281
    %v1285 = vsel %vm226, %v1272, 0
    %v1288 = vsel %vm226, %v1277, 0
    %1290 = vmatprep.subr.mxu0 0.0
    %1291 = vmatpush1.msra.mxu0 %v1282
    %1292 = vmatprep.subr.mxu0 0.0
    %1293 = vmatpush1.msra.mxu0 0.0
    %1294 = vmatprep.subr.mxu0 0.0
    %1295 = vmatpush1.msra.mxu0 0.0
    %1296 = vmatprep.subr.mxu0 0.0
    %1297 = vmatpush1.msra.mxu0 0.0
    %1298 = vmatprep.subr.mxu0 0.0
    %1299 = vmatpush1.msra.mxu0 0.0
    %1300 = vmatprep.subr.mxu0 0.0
    %1301 = vmatpush1.msra.mxu0 0.0
    %1302 = vmatprep.subr.mxu0 0.0
    %1303 = vmatpush1.msra.mxu0 0.0
    %1304 = vmatprep.subr.mxu0 0.0
    %1305 = vmatpush1.msra.mxu0 0.0
    %1306 = vmatprep.subr.mxu0 0.0
    %1307 = vmatpush1.msra.mxu0 0.0
    %1308 = vmatprep.subr.mxu0 0.0
    %1309 = vmatpush1.msra.mxu0 0.0
    %1310 = vmatprep.subr.mxu0 0.0
    %1311 = vmatpush1.msra.mxu0 0.0
    %1312 = vmatprep.subr.mxu0 0.0
    %1313 = vmatpush1.msra.mxu0 0.0
    %1314 = vmatprep.subr.mxu0 0.0
    %1315 = vmatpush1.msra.mxu0 0.0
    %1316 = vmatprep.subr.mxu0 0.0
    %1317 = vmatpush1.msra.mxu0 0.0
    %1318 = vmatprep.subr.mxu0 0.0
    %1319 = vmatpush1.msra.mxu0 0.0
    %1320 = vmatprep.subr.mxu0 0.0
    %1321 = vmatpush1.msra.mxu0 0.0
    %1322 = vmatprep.subr.mxu0 0.0
    %1323 = vmatpush1.msra.mxu0 0.0
    %1324 = vmatprep.subr.mxu0 0.0
    %1325 = vmatpush1.msra.mxu0 0.0
    %1326 = vmatprep.subr.mxu0 0.0
    %1327 = vmatpush1.msra.mxu0 0.0
    %1328 = vmatprep.subr.mxu0 0.0
    %1329 = vmatpush1.msra.mxu0 0.0
    %1330 = vmatprep.subr.mxu0 0.0
    %1331 = vmatpush1.msra.mxu0 0.0
    %1332 = vmatprep.subr.mxu0 0.0
    %1333 = vmatpush1.msra.mxu0 0.0
    %1334 = vmatprep.subr.mxu0 0.0
    %1335 = vmatpush1.msra.mxu0 0.0
    %1336 = vmatprep.subr.mxu0 0.0
    %1337 = vmatpush1.msra.mxu0 0.0
    %1338 = vmatprep.subr.mxu0 0.0
    %1339 = vmatpush1.msra.mxu0 0.0
    %1340 = vmatprep.subr.mxu0 0.0
    %1341 = vmatpush1.msra.mxu0 0.0
    %1342 = vmatprep.subr.mxu0 0.0
    %1343 = vmatpush1.msra.mxu0 0.0
    %1344 = vmatprep.subr.mxu0 0.0
    %1345 = vmatpush1.msra.mxu0 0.0
    %1346 = vmatprep.subr.mxu0 0.0
    %1347 = vmatpush1.msra.mxu0 0.0
    %1348 = vmatprep.subr.mxu0 0.0
    %1349 = vmatpush1.msra.mxu0 0.0
    %1350 = vmatprep.subr.mxu0 0.0
    %1351 = vmatpush1.msra.mxu0 0.0
    %1352 = vmatprep.subr.mxu0 0.0
    %1353 = vmatpush1.msra.mxu0 0.0
    %1354 = vmatprep.mubr.f32.mxu0 0.0
    %1355 = vmatmul.mubr.f32.gmra.mrb[0].mxu0 %v1285
    %v1356 = vpop.f32.mrb[0].mxu0
    %v1357 = vadd.f32 0.0, %v1356
    %v1358 = vpop.f32.mrb[0].mxu0
    %1359 = vmatprep.mubr.f32.mxu0 0.0
    %1360 = vmatmul.mubr.f32.gmra.mrb[0].mxu0 %v1288
    %v1361 = vpop.f32.mrb[0].mxu0
    %v1362 = vadd.f32 0.0, %v1361
    %v1363 = vpop.f32.mrb[0].mxu0
    %1364 = vdwg.mxu0
    %v1365 = vadd.f32 %v1078, %v1357
    %v1366 = vadd.f32 %v1079, %v1362
    %v1367 = vld [vmem:[%s4 + $0x1] sm:$0x1]
    %v1368 = vlaneseq
    %v1369 = vshrl.u32 %v1368, 7
    %v1370 = vsub.s32 0, %v1369
    %v1371 = vrot.slane %v1367, %v1370
    %v1372 = vadd.f32 %v1365, %v1371
    %v1373 = vadd.f32 %v1366, %v1371
    %v1374 = vadd.f32 %v119, %v1372
    %v1375 = vadd.f32 %v124, %v1373
    %v1376 = vld [vmem:[%s4 + $0x2] sm:$0x1]
    %v1377 = vld [vmem:[%s4 + $0x3] sm:$0x1]
    %v1378 = vsel %vm136, %v1374, 0.0
    %1379 = vadd.xlane.f32.xlu0 %v1378
    %v1380 = vpop.xlane.xlu0 %1379
    %v1381 = vsel %vm136, %v1375, 0.0
    %1382 = vadd.xlane.f32.xlu0 %v1381
    %v1383 = vpop.xlane.xlu0 %1382
    %v1384 = vrcp.pop 32.0
    %v1385 = vmul.f32 %v1380, %v1384
    %v1386 = vmul.f32 %v1383, %v1384
    %v1387 = vsub.f32 %v1374, %v1385
    %v1388 = vsub.f32 %v1375, %v1386
    %v1389 = vmul.f32 %v1387, %v1387
    %v1390 = vmul.f32 %v1388, %v1388
    %v1391 = vsel %vm136, %v1389, 0.0
    %1392 = vadd.xlane.f32.xlu0 %v1391
    %v1393 = vpop.xlane.xlu0 %1392
    %v1394 = vsel %vm136, %v1390, 0.0
    %1395 = vadd.xlane.f32.xlu0 %v1394
    %v1396 = vpop.xlane.xlu0 %1395
    %v1397 = vmul.f32 %v1393, %v1384
    %v1398 = vmul.f32 %v1396, %v1384
    %v1399 = vadd.f32 %v1397, 1e-05
    %v1400 = vadd.f32 %v1398, 1e-05
    %v1401 = vrsqrt.pop %v1399
    %v1402 = vrsqrt.pop %v1400
    %v1403 = vmul.f32 %v1387, %v1401
    %v1404 = vmul.f32 %v1388, %v1402
    %v1405 = vlaneseq
    %v1406 = vshrl.u32 %v1405, 7
    %v1407 = vsub.s32 0, %v1406
    %v1408 = vrot.slane %v1376, %v1407
    %v1409 = vmul.f32 %v1403, %v1408
    %v1410 = vmul.f32 %v1404, %v1408
    %v1411 = vlaneseq
    %v1412 = vshrl.u32 %v1411, 7
    %v1413 = vsub.s32 0, %v1412
    %v1414 = vrot.slane %v1377, %v1413
    %v1415 = vadd.f32 %v1409, %v1414
    %v1416 = vadd.f32 %v1410, %v1414
    %v1417 = vld [vmem:[%s3 + $0x8] sm:$0xff]
    %v1418 = vld [vmem:[%s3 + $0x18] sm:$0xff]
    %v1419 = vld [vmem:[%s3 + $0x28] sm:$0xff]
    %v1420 = vld [vmem:[%s3 + $0x38] sm:$0xff]
    %v1421 = vld [vmem:[%s4 + $0x4] sm:$0x1]
    %v1422 = vlaneseq
    %v1423 = vshrl.u32 %v1422, 7
    %v1424 = vsub.s32 0, %v1423
    %v1425 = vrot.slane %v1421, %v1424
    %v1427 = vsel %vm136, %v1415, 0
    %v1430 = vsel %vm136, %v1416, 0
    %1432 = vmatprep.subr.mxu0 0.0
    %1433 = vmatpush1.msra.mxu0 %v1417
    %1434 = vmatprep.subr.mxu0 0.0
    %1435 = vmatpush1.msra.mxu0 %v1418
    %1436 = vmatprep.subr.mxu0 0.0
    %1437 = vmatpush1.msra.mxu0 %v1419
    %1438 = vmatprep.subr.mxu0 0.0
    %1439 = vmatpush1.msra.mxu0 %v1420
    %1440 = vmatprep.subr.mxu0 0.0
    %1441 = vmatpush1.msra.mxu0 0.0
    %1442 = vmatprep.subr.mxu0 0.0
    %1443 = vmatpush1.msra.mxu0 0.0
    %1444 = vmatprep.subr.mxu0 0.0
    %1445 = vmatpush1.msra.mxu0 0.0
    %1446 = vmatprep.subr.mxu0 0.0
    %1447 = vmatpush1.msra.mxu0 0.0
    %1448 = vmatprep.subr.mxu0 0.0
    %1449 = vmatpush1.msra.mxu0 0.0
    %1450 = vmatprep.subr.mxu0 0.0
    %1451 = vmatpush1.msra.mxu0 0.0
    %1452 = vmatprep.subr.mxu0 0.0
    %1453 = vmatpush1.msra.mxu0 0.0
    %1454 = vmatprep.subr.mxu0 0.0
    %1455 = vmatpush1.msra.mxu0 0.0
    %1456 = vmatprep.subr.mxu0 0.0
    %1457 = vmatpush1.msra.mxu0 0.0
    %1458 = vmatprep.subr.mxu0 0.0
    %1459 = vmatpush1.msra.mxu0 0.0
    %1460 = vmatprep.subr.mxu0 0.0
    %1461 = vmatpush1.msra.mxu0 0.0
    %1462 = vmatprep.subr.mxu0 0.0
    %1463 = vmatpush1.msra.mxu0 0.0
    %1464 = vmatprep.subr.mxu0 0.0
    %1465 = vmatpush1.msra.mxu0 0.0
    %1466 = vmatprep.subr.mxu0 0.0
    %1467 = vmatpush1.msra.mxu0 0.0
    %1468 = vmatprep.subr.mxu0 0.0
    %1469 = vmatpush1.msra.mxu0 0.0
    %1470 = vmatprep.subr.mxu0 0.0
    %1471 = vmatpush1.msra.mxu0 0.0
    %1472 = vmatprep.subr.mxu0 0.0
    %1473 = vmatpush1.msra.mxu0 0.0
    %1474 = vmatprep.subr.mxu0 0.0
    %1475 = vmatpush1.msra.mxu0 0.0
    %1476 = vmatprep.subr.mxu0 0.0
    %1477 = vmatpush1.msra.mxu0 0.0
    %1478 = vmatprep.subr.mxu0 0.0
    %1479 = vmatpush1.msra.mxu0 0.0
    %1480 = vmatprep.subr.mxu0 0.0
    %1481 = vmatpush1.msra.mxu0 0.0
    %1482 = vmatprep.subr.mxu0 0.0
    %1483 = vmatpush1.msra.mxu0 0.0
    %1484 = vmatprep.subr.mxu0 0.0
    %1485 = vmatpush1.msra.mxu0 0.0
    %1486 = vmatprep.subr.mxu0 0.0
    %1487 = vmatpush1.msra.mxu0 0.0
    %1488 = vmatprep.subr.mxu0 0.0
    %1489 = vmatpush1.msra.mxu0 0.0
    %1490 = vmatprep.subr.mxu0 0.0
    %1491 = vmatpush1.msra.mxu0 0.0
    %1492 = vmatprep.subr.mxu0 0.0
    %1493 = vmatpush1.msra.mxu0 0.0
    %1494 = vmatprep.subr.mxu0 0.0
    %1495 = vmatpush1.msra.mxu0 0.0
    %1496 = vmatprep.mubr.f32.mxu0 0.0
    %1497 = vmatmul.mubr.f32.gmra.mrb[0].mxu0 %v1427
    %v1498 = vpop.f32.mrb[0].mxu0
    %v1499 = vadd.f32 %v1425, %v1498
    %v1500 = vpop.f32.mrb[0].mxu0
    %1501 = vmatprep.mubr.f32.mxu0 0.0
    %1502 = vmatmul.mubr.f32.gmra.mrb[0].mxu0 %v1430
    %v1503 = vpop.f32.mrb[0].mxu0
    %v1504 = vadd.f32 %v1425, %v1503
    %v1505 = vpop.f32.mrb[0].mxu0
    %1506 = vdwg.mxu0
    %v1507 = vmax.f32 %v1499, 0.0
    %v1508 = vmax.f32 %v1504, 0.0
    %v1509 = vld [vmem:[%s2 + $0x40] sm:$0xff]
    %v1510 = vld [vmem:[%s2 + $0x48] sm:$0xff]
    %v1511 = vld [vmem:[%s2 + $0x50] sm:$0xff]
    %v1512 = vld [vmem:[%s2 + $0x58] sm:$0xff]
    %v1513 = vld [vmem:[%s2 + $0x60] sm:$0xff]
    %v1514 = vld [vmem:[%s2 + $0x68] sm:$0xff]
    %v1515 = vld [vmem:[%s2 + $0x70] sm:$0xff]
    %v1516 = vld [vmem:[%s2 + $0x78] sm:$0xff]
    %v1517 = vld [vmem:[%s4 + $0x5] sm:$0x1]
    %v1518 = vlaneseq
    %v1519 = vshrl.u32 %v1518, 7
    %v1520 = vsub.s32 0, %v1519
    %v1521 = vrot.slane %v1517, %v1520
    %v1523 = vsel %vm45, %v1507, 0
    %v1526 = vsel %vm45, %v1508, 0
    %1528 = vmatprep.subr.mxu0 0.0
    %1529 = vmatpush1.msra.mxu0 %v1509
    %1530 = vmatprep.subr.mxu0 0.0
    %1531 = vmatpush1.msra.mxu0 %v1510
    %1532 = vmatprep.subr.mxu0 0.0
    %1533 = vmatpush1.msra.mxu0 %v1511
    %1534 = vmatprep.subr.mxu0 0.0
    %1535 = vmatpush1.msra.mxu0 %v1512
    %1536 = vmatprep.subr.mxu0 0.0
    %1537 = vmatpush1.msra.mxu0 %v1513
    %1538 = vmatprep.subr.mxu0 0.0
    %1539 = vmatpush1.msra.mxu0 %v1514
    %1540 = vmatprep.subr.mxu0 0.0
    %1541 = vmatpush1.msra.mxu0 %v1515
    %1542 = vmatprep.subr.mxu0 0.0
    %1543 = vmatpush1.msra.mxu0 %v1516
    %1544 = vmatprep.subr.mxu0 0.0
    %1545 = vmatpush1.msra.mxu0 0.0
    %1546 = vmatprep.subr.mxu0 0.0
    %1547 = vmatpush1.msra.mxu0 0.0
    %1548 = vmatprep.subr.mxu0 0.0
    %1549 = vmatpush1.msra.mxu0 0.0
    %1550 = vmatprep.subr.mxu0 0.0
    %1551 = vmatpush1.msra.mxu0 0.0
    %1552 = vmatprep.subr.mxu0 0.0
    %1553 = vmatpush1.msra.mxu0 0.0
    %1554 = vmatprep.subr.mxu0 0.0
    %1555 = vmatpush1.msra.mxu0 0.0
    %1556 = vmatprep.subr.mxu0 0.0
    %1557 = vmatpush1.msra.mxu0 0.0
    %1558 = vmatprep.subr.mxu0 0.0
    %1559 = vmatpush1.msra.mxu0 0.0
    %1560 = vmatprep.subr.mxu0 0.0
    %1561 = vmatpush1.msra.mxu0 0.0
    %1562 = vmatprep.subr.mxu0 0.0
    %1563 = vmatpush1.msra.mxu0 0.0
    %1564 = vmatprep.subr.mxu0 0.0
    %1565 = vmatpush1.msra.mxu0 0.0
    %1566 = vmatprep.subr.mxu0 0.0
    %1567 = vmatpush1.msra.mxu0 0.0
    %1568 = vmatprep.subr.mxu0 0.0
    %1569 = vmatpush1.msra.mxu0 0.0
    %1570 = vmatprep.subr.mxu0 0.0
    %1571 = vmatpush1.msra.mxu0 0.0
    %1572 = vmatprep.subr.mxu0 0.0
    %1573 = vmatpush1.msra.mxu0 0.0
    %1574 = vmatprep.subr.mxu0 0.0
    %1575 = vmatpush1.msra.mxu0 0.0
    %1576 = vmatprep.subr.mxu0 0.0
    %1577 = vmatpush1.msra.mxu0 0.0
    %1578 = vmatprep.subr.mxu0 0.0
    %1579 = vmatpush1.msra.mxu0 0.0
    %1580 = vmatprep.subr.mxu0 0.0
    %1581 = vmatpush1.msra.mxu0 0.0
    %1582 = vmatprep.subr.mxu0 0.0
    %1583 = vmatpush1.msra.mxu0 0.0
    %1584 = vmatprep.subr.mxu0 0.0
    %1585 = vmatpush1.msra.mxu0 0.0
    %1586 = vmatprep.subr.mxu0 0.0
    %1587 = vmatpush1.msra.mxu0 0.0
    %1588 = vmatprep.subr.mxu0 0.0
    %1589 = vmatpush1.msra.mxu0 0.0
    %1590 = vmatprep.subr.mxu0 0.0
    %1591 = vmatpush1.msra.mxu0 0.0
    %1592 = vmatprep.mubr.f32.mxu0 0.0
    %1593 = vmatmul.mubr.f32.gmra.mrb[0].mxu0 %v1523
    %v1594 = vpop.f32.mrb[0].mxu0
    %v1595 = vadd.f32 %v1521, %v1594
    %v1596 = vpop.f32.mrb[0].mxu0
    %1597 = vmatprep.mubr.f32.mxu0 0.0
    %1598 = vmatmul.mubr.f32.gmra.mrb[0].mxu0 %v1526
    %v1599 = vpop.f32.mrb[0].mxu0
    %v1600 = vadd.f32 %v1521, %v1599
    %v1601 = vpop.f32.mrb[0].mxu0
    %1602 = vdwg.mxu0
    %v1603 = vadd.f32 %v1415, %v1595
    %v1604 = vadd.f32 %v1416, %v1600
    %v1605 = vld [vmem:[%s4 + $0x6] sm:$0x1]
    %v1606 = vld [vmem:[%s4 + $0x7] sm:$0x1]
    %v1607 = vsel %vm136, %v1603, 0.0
    %1608 = vadd.xlane.f32.xlu0 %v1607
    %v1609 = vpop.xlane.xlu0 %1608
    %v1610 = vsel %vm136, %v1604, 0.0
    %1611 = vadd.xlane.f32.xlu0 %v1610
    %v1612 = vpop.xlane.xlu0 %1611
    %v1613 = vmul.f32 %v1609, %v1384
    %v1614 = vmul.f32 %v1612, %v1384
    %v1615 = vsub.f32 %v1603, %v1613
    %v1616 = vsub.f32 %v1604, %v1614
    %v1617 = vmul.f32 %v1615, %v1615
    %v1618 = vmul.f32 %v1616, %v1616
    %v1619 = vsel %vm136, %v1617, 0.0
    %1620 = vadd.xlane.f32.xlu0 %v1619
    %v1621 = vpop.xlane.xlu0 %1620
    %v1622 = vsel %vm136, %v1618, 0.0
    %1623 = vadd.xlane.f32.xlu0 %v1622
    %v1624 = vpop.xlane.xlu0 %1623
    %v1625 = vmul.f32 %v1621, %v1384
    %v1626 = vmul.f32 %v1624, %v1384
    %v1627 = vadd.f32 %v1625, 1e-05
    %v1628 = vadd.f32 %v1626, 1e-05
    %v1629 = vrsqrt.pop %v1627
    %v1630 = vrsqrt.pop %v1628
    %v1631 = vmul.f32 %v1615, %v1629
    %v1632 = vmul.f32 %v1616, %v1630
    %v1633 = vlaneseq
    %v1634 = vshrl.u32 %v1633, 7
    %v1635 = vsub.s32 0, %v1634
    %v1636 = vrot.slane %v1605, %v1635
    %v1637 = vmul.f32 %v1631, %v1636
    %v1638 = vmul.f32 %v1632, %v1636
    %v1639 = vlaneseq
    %v1640 = vshrl.u32 %v1639, 7
    %v1641 = vsub.s32 0, %v1640
    %v1642 = vrot.slane %v1606, %v1641
    %v1643 = vadd.f32 %v1637, %v1642
    %v1644 = vadd.f32 %v1638, %v1642
    %1645 = vst.msk [vmem:[#allocation2] sm:$0xff] %vm136, %v1643
    %1646 = vst.msk [vmem:[#allocation2 + $0x8] sm:$0xff] %vm136, %v1644
    // Predicated region
    $region22: #{tpu_custom_call.1} parent=1 // pred_check
      _
    $region23: #{tpu_custom_call.1} parent=1 // pred_check_branch
      %1648 = sbr.rel (0) target = $region25
    $region24: #{tpu_custom_call.1} parent=1 // pred_region
      %s1650 = ssub.s32 256, 256
      %1651 = vsyncadd [#allocation3], %s1650
      %s1652 = sshll.u32 [#allocation2], 4
      %s1653 = int_to_ptr.vmem [resolvable:$true] %s1652
      %1658 = dma.vmem_to_hbm [thread:$0]  %s1653, 256, %s5, [#allocation3], 128, 128, 8
    $region25: #{tpu_custom_call.1} parent=1 // pred_fallthru
      _
    // Predicated region
    $region26: #{tpu_custom_call.1} parent=1 // pred_check
      _
    $region27: #{tpu_custom_call.1} parent=1 // pred_check_branch
      %1660 = sbr.rel (0) target = $region29
    $region28: #{tpu_custom_call.1} parent=1 // pred_region
      %1661 = dma.done [#allocation3], 256
    $region29: #{tpu_custom_call.1} parent=1 // pred_fallthru
      _
    %1662 = vsyncpa [#allocation3], 1

</llo_original>
